<compile_context>
chip_gen: v5e
topology: v5e:2x2
jax: 0.10.0
libtpu: 0.0.40
codegen_flags: <defaults>
</compile_context>

<pallas_src>
import jax
import jax.numpy as jnp
from jax.experimental import pallas as pl
from jax.experimental.pallas import tpu as pltpu


# --------------------------- fused DoubleConv + MaxPool kernel ---------------------------
def _make_downsample_kernel(H, W, Cin, Cout, Th):
    """Builds the fused kernel for a (Th output rows) x (full width) tile."""
    R1 = Th + 2          # conv1 rows needed by this tile (1-row halo on each side)

    def kernel(xc_ref, xt_ref, xb_ref, w1_ref, b1_ref, w2_ref, b2_ref,
               down_ref, p_ref, yv_ref):
        # xc_ref: (1, Th, W, Cin)  center input rows  [h0,      h0+Th)
        # xt_ref: (1, 2,  W, Cin)  top-halo rows      [h0-2,    h0)     (clamped at t==0)
        # xb_ref: (1, 2,  W, Cin)  bottom-halo rows   [h0+Th,   h0+Th+2)(clamped at last)
        # w1_ref: (9*Cin,  Cout)   conv1 weights, taps flattened kh*3+kw (bf16)
        # w2_ref: (9*Cout, Cout)   conv2 weights (bf16)
        # b1_ref/b2_ref: (1, Cout) biases (f32)
        # down_ref: (1, Th, W, Cout)          conv output tile
        # p_ref:    (1, Th//2, W//2, Cout)    pooled output tile
        # yv_ref:   ((Th//2)*W, Cout) f32     scratch for the horizontal pooling step
        t = pl.program_id(1)
        h0 = t * Th

        # ---- assemble input rows [h0-2, h0+Th+2); zero rows that fall outside the image
        xrows = jnp.concatenate(
            [xt_ref[0, :, :, :], xc_ref[0, :, :, :], xb_ref[0, :, :, :]], axis=0)
        ri = jax.lax.broadcasted_iota(jnp.int32, (Th + 4, 1, 1), 0) + (h0 - 2)
        xrows = jnp.where((ri >= 0) & (ri < H), xrows, jnp.zeros_like(xrows))
        # conv1 "padding=1" along W: one zero column on each side
        zc = jnp.zeros((Th + 4, 1, Cin), dtype=xrows.dtype)
        xf = jnp.concatenate([zc, xrows, zc], axis=1)                 # (Th+4, W+2, Cin)

        # ---- conv1 (3x3, pad=1) + bias + ReLU over Th+2 rows: one fat im2col matmul
        p1 = jnp.concatenate(
            [xf[kh:kh + R1, kw:kw + W, :] for kh in range(3) for kw in range(3)],
            axis=-1)                                                  # (R1, W, 9*Cin) bf16
        a1 = jnp.dot(p1.reshape(R1 * W, 9 * Cin), w1_ref[...],
                     preferred_element_type=jnp.float32)              # (R1*W, Cout) f32
        a1 = jnp.maximum(a1 + b1_ref[...], 0.0)
        mid = a1.reshape(R1, W, Cout).astype(jnp.bfloat16)

        # conv2's zero padding: rows of the intermediate outside the image are zeros,
        # plus one zero column on each side.
        rm = jax.lax.broadcasted_iota(jnp.int32, (R1, 1, 1), 0) + (h0 - 1)
        mid = jnp.where((rm >= 0) & (rm < H), mid, jnp.zeros_like(mid))
        zc2 = jnp.zeros((R1, 1, Cout), dtype=mid.dtype)
        midf = jnp.concatenate([zc2, mid, zc2], axis=1)               # (R1, W+2, Cout)

        # ---- conv2 (3x3, pad=1) + bias + ReLU over Th rows
        p2 = jnp.concatenate(
            [midf[kh:kh + Th, kw:kw + W, :] for kh in range(3) for kw in range(3)],
            axis=-1)                                                  # (Th, W, 9*Cout) bf16
        a2 = jnp.dot(p2.reshape(Th * W, 9 * Cout), w2_ref[...],
                     preferred_element_type=jnp.float32)              # (Th*W, Cout) f32
        a2 = jnp.maximum(a2 + b2_ref[...], 0.0)
        y = a2.reshape(Th, W, Cout)
        down_ref[0, :, :, :] = y.astype(down_ref.dtype)

        # ---- fused 2x2 max pool, stride 2
        # vertical: pair adjacent rows (leading-dim split only -> layout-safe)
        yr = y.reshape(Th // 2, 2, W, Cout)
        yv = jnp.maximum(yr[:, 0, :, :], yr[:, 1, :, :])              # (Th//2, W, Cout)
        # horizontal: adjacent columns are adjacent rows of the flattened buffer;
        # pick even/odd rows with strided reads.
        yv_ref[...] = yv.reshape((Th // 2) * W, Cout)
        half = (Th // 2) * (W // 2)
        pe = yv_ref[pl.ds(0, half, stride=2), :]
        po = yv_ref[pl.ds(1, half, stride=2), :]
        p_ref[0, :, :, :] = jnp.maximum(pe, po).reshape(
            Th // 2, W // 2, Cout).astype(p_ref.dtype)

    return kernel


def _pick_row_tile(H):
    for th in (32, 16, 8, 4, 2):
        if H % th == 0:
            return th
    raise ValueError("H must have an even divisor <= 32 (H must be even)")


# --------------------------------- DownSample forward -----------------------------------
def downsample_forward(x_nchw, params, *, row_tile=None, out_dtype=jnp.float32):
    """Matches DownSample.forward: returns (down, p) in NCHW."""
    w1, b1, w2, b2 = params                     # w: (3,3,Cin,Cout) HWIO, b: (Cout,)
    N, Cin, H, W = x_nchw.shape
    Cout = w1.shape[-1]
    assert w1.shape == (3, 3, Cin, Cout) and w2.shape == (3, 3, Cout, Cout)
    assert H % 2 == 0 and W % 2 == 0, "2x2/stride-2 pooling needs even H, W"

    Th = row_tile if row_tile is not None else _pick_row_tile(H)
    assert Th % 2 == 0 and H % Th == 0, "row_tile must be even and divide H"
    nt = H // Th
    hh = Th // 2

    # NCHW -> NHWC, bf16 activations / weights (f32 accumulation inside the kernel)
    x = jnp.transpose(x_nchw, (0, 2, 3, 1)).astype(jnp.bfloat16)
    w1f = w1.reshape(9 * Cin, Cout).astype(jnp.bfloat16)      # rows ordered (kh, kw, ci)
    w2f = w2.reshape(9 * Cout, Cout).astype(jnp.bfloat16)
    b1r = b1.reshape(1, Cout).astype(jnp.float32)
    b2r = b2.reshape(1, Cout).astype(jnp.float32)

    kernel = _make_downsample_kernel(H, W, Cin, Cout, Th)

    down, p = pl.pallas_call(
        kernel,
        out_shape=(jax.ShapeDtypeStruct((N, H, W, Cout), out_dtype),
                   jax.ShapeDtypeStruct((N, H // 2, W // 2, Cout), out_dtype)),
        grid=(N, nt),
        in_specs=[
            # center rows of the tile
            pl.BlockSpec((1, Th, W, Cin), lambda n, t: (n, t, 0, 0)),
            # 2-row top halo (clamped at the first tile; zeroed in-kernel)
            pl.BlockSpec((1, 2, W, Cin),
                         lambda n, t: (n, jnp.maximum(t * hh - 1, 0), 0, 0)),
            # 2-row bottom halo (clamped at the last tile; zeroed in-kernel)
            pl.BlockSpec((1, 2, W, Cin),
                         lambda n, t: (n, jnp.minimum((t + 1) * hh, H // 2 - 1), 0, 0)),
            # weights / biases: resident (same block every step)
            pl.BlockSpec((9 * Cin, Cout), lambda n, t: (0, 0)),
            pl.BlockSpec((1, Cout), lambda n, t: (0, 0)),
            pl.BlockSpec((9 * Cout, Cout), lambda n, t: (0, 0)),
            pl.BlockSpec((1, Cout), lambda n, t: (0, 0)),
        ],
        out_specs=(
            pl.BlockSpec((1, Th, W, Cout), lambda n, t: (n, t, 0, 0)),
            pl.BlockSpec((1, Th // 2, W // 2, Cout), lambda n, t: (n, t, 0, 0)),
        ),
        scratch_shapes=[pltpu.VMEM(((Th // 2) * W, Cout), jnp.float32)],
        compiler_params=pltpu.CompilerParams(
            dimension_semantics=("parallel", "parallel"),
            vmem_limit_bytes=32 * 1024 * 1024),
    )(x, x, x, w1f, b1r, w2f, b2r)

    return jnp.transpose(down, (0, 3, 1, 2)), jnp.transpose(p, (0, 3, 1, 2))


# ----------------------------------- pure-JAX reference ----------------------------------
def _reference(x_nchw, params):
    w1, b1, w2, b2 = params
    dn = ('NHWC', 'HWIO', 'NHWC')
    x = jnp.transpose(x_nchw, (0, 2, 3, 1))
    y = jax.lax.conv_general_dilated(x, w1, (1, 1), 'SAME', dimension_numbers=dn) + b1
    y = jnp.maximum(y, 0.0)
    y = jax.lax.conv_general_dilated(y, w2, (1, 1), 'SAME', dimension_numbers=dn) + b2
    y = jnp.maximum(y, 0.0)
    p = jax.lax.reduce_window(y, -jnp.inf, jax.lax.max, (1, 2, 2, 1), (1, 2, 2, 1), 'VALID')
    return jnp.transpose(y, (0, 3, 1, 2)), jnp.transpose(p, (0, 3, 1, 2))


if __name__ == "__main__":
    N, Cin, Cout, H, W = 2, 4, 8, 16, 16

    key = jax.random.PRNGKey(0)
    kx, kw1, kb1, kw2, kb2 = jax.random.split(key, 5)

    x = jax.random.normal(kx, (N, Cin, H, W), dtype=jnp.float32)
    w1 = 0.2 * jax.random.normal(kw1, (3, 3, Cin, Cout), dtype=jnp.float32)
    b1 = 0.1 * jax.random.normal(kb1, (Cout,), dtype=jnp.float32)
    w2 = 0.2 * jax.random.normal(kw2, (3, 3, Cout, Cout), dtype=jnp.float32)
    b2 = 0.1 * jax.random.normal(kb2, (Cout,), dtype=jnp.float32)
    params = (w1, b1, w2, b2)

    # row_tile=4 -> 4 row-tiles per image: exercises first / interior / last tile paths.
    down, p = downsample_forward(x, params, row_tile=4)
    jax.block_until_ready((down, p))

    down_ref, p_ref = _reference(x, params)
    assert down.shape == (N, Cout, H, W) and p.shape == (N, Cout, H // 2, W // 2)
    # bf16 matmuls with f32 accumulation: loose-ish tolerance vs. the f32 reference.
    assert jnp.allclose(down, down_ref, rtol=1e-1, atol=1e-1), \
        float(jnp.max(jnp.abs(down - down_ref)))
    assert jnp.allclose(p, p_ref, rtol=1e-1, atol=1e-1), \
        float(jnp.max(jnp.abs(p - p_ref)))

    print("KERNEL_OK")
</pallas_src>

<mosaic_0001>
module attributes {stable_mosaic.version = 11 : i64} {
  func.func @kernel(%arg0: i32, %arg1: i32, %arg2: memref<1x4x16x4xbf16, #tpu.memory_space<vmem>>, %arg3: memref<1x2x16x4xbf16, #tpu.memory_space<vmem>>, %arg4: memref<1x2x16x4xbf16, #tpu.memory_space<vmem>>, %arg5: memref<36x8xbf16, #tpu.memory_space<vmem>>, %arg6: memref<1x8xf32, #tpu.memory_space<vmem>>, %arg7: memref<72x8xbf16, #tpu.memory_space<vmem>>, %arg8: memref<1x8xf32, #tpu.memory_space<vmem>>, %arg9: memref<1x4x16x8xf32, #tpu.memory_space<vmem>>, %arg10: memref<1x2x8x8xf32, #tpu.memory_space<vmem>>, %arg11: memref<32x8xf32, #tpu.memory_space<vmem>>) attributes {dimension_semantics = [#tpu.dimension_semantics<parallel>, #tpu.dimension_semantics<parallel>], iteration_bounds = array<i64: 2, 4>, scalar_prefetch = 0 : i64, scratch_operands = 1 : i64, tpu.core_type = #tpu.core_type<tc>, window_params = [{transform_indices = @transform_0, window_bounds = array<i64: 1, 4, 16, 4>}, {transform_indices = @transform_1, window_bounds = array<i64: 1, 2, 16, 4>}, {transform_indices = @transform_2, window_bounds = array<i64: 1, 2, 16, 4>}, {pipeline_mode = #tpu.pipeline_mode<synchronous>, transform_indices = @transform_3, window_bounds = array<i64: 36, 8>}, {pipeline_mode = #tpu.pipeline_mode<synchronous>, transform_indices = @transform_4, window_bounds = array<i64: 1, 8>}, {pipeline_mode = #tpu.pipeline_mode<synchronous>, transform_indices = @transform_5, window_bounds = array<i64: 72, 8>}, {pipeline_mode = #tpu.pipeline_mode<synchronous>, transform_indices = @transform_6, window_bounds = array<i64: 1, 8>}, {transform_indices = @transform_7, window_bounds = array<i64: 1, 4, 16, 8>}, {transform_indices = @transform_8, window_bounds = array<i64: 1, 2, 8, 8>}]} {
    %c4_i32 = arith.constant 4 : i32
    %0 = arith.muli %arg1, %c4_i32 : i32
    %c0 = arith.constant 0 : index
    %c0_0 = arith.constant 0 : index
    %c0_1 = arith.constant 0 : index
    %c0_2 = arith.constant 0 : index
    %1 = vector.load %arg3[%c0, %c0_0, %c0_1, %c0_2] : memref<1x2x16x4xbf16, #tpu.memory_space<vmem>>, vector<1x2x16x4xbf16>
    %2 = vector.shape_cast %1 : vector<1x2x16x4xbf16> to vector<2x16x4xbf16>
    %c0_3 = arith.constant 0 : index
    %c0_4 = arith.constant 0 : index
    %c0_5 = arith.constant 0 : index
    %c0_6 = arith.constant 0 : index
    %3 = vector.load %arg2[%c0_3, %c0_4, %c0_5, %c0_6] : memref<1x4x16x4xbf16, #tpu.memory_space<vmem>>, vector<1x4x16x4xbf16>
    %4 = vector.shape_cast %3 : vector<1x4x16x4xbf16> to vector<4x16x4xbf16>
    %c0_7 = arith.constant 0 : index
    %c0_8 = arith.constant 0 : index
    %c0_9 = arith.constant 0 : index
    %c0_10 = arith.constant 0 : index
    %5 = vector.load %arg4[%c0_7, %c0_8, %c0_9, %c0_10] : memref<1x2x16x4xbf16, #tpu.memory_space<vmem>>, vector<1x2x16x4xbf16>
    %6 = vector.shape_cast %5 : vector<1x2x16x4xbf16> to vector<2x16x4xbf16>
    %7 = tpu.concatenate %2, %4, %6 in 0 : vector<2x16x4xbf16>, vector<4x16x4xbf16>, vector<2x16x4xbf16> -> vector<8x16x4xbf16>
    %8 = tpu.iota {dimensions = array<i32: 0>} : vector<8x1x1xi32>
    %c2_i32 = arith.constant 2 : i32
    %9 = arith.subi %0, %c2_i32 : i32
    %10 = vector.broadcast %9 : i32 to vector<8x1x1xi32>
    %11 = arith.addi %8, %10 : vector<8x1x1xi32>
    %c0_i32 = arith.constant 0 : i32
    %12 = vector.broadcast %c0_i32 : i32 to vector<8x1x1xi32>
    %13 = arith.cmpi sge, %11, %12 : vector<8x1x1xi32>
    %c16_i32 = arith.constant 16 : i32
    %14 = vector.broadcast %c16_i32 : i32 to vector<8x1x1xi32>
    %15 = arith.cmpi slt, %11, %14 : vector<8x1x1xi32>
    %16 = arith.andi %13, %15 : vector<8x1x1xi1>
    %cst = arith.constant 0.000000e+00 : bf16
    %17 = vector.broadcast %cst : bf16 to vector<8x16x4xbf16>
    %18 = vector.shape_cast %16 : vector<8x1x1xi1> to vector<8x1x1xi1>
    %19 = vector.broadcast %18 : vector<8x1x1xi1> to vector<8x16x4xi1>
    %20 = arith.select %19, %7, %17 : vector<8x16x4xi1>, vector<8x16x4xbf16>
    %cst_11 = arith.constant 0.000000e+00 : bf16
    %21 = vector.broadcast %cst_11 : bf16 to vector<8x1x4xbf16>
    %22 = tpu.concatenate %21, %20, %21 in 1 : vector<8x1x4xbf16>, vector<8x16x4xbf16>, vector<8x1x4xbf16> -> vector<8x18x4xbf16>
    %23 = vector.extract_strided_slice %22 {offsets = [0, 0, 0], sizes = [6, 16, 4], strides = [1, 1, 1]} : vector<8x18x4xbf16> to vector<6x16x4xbf16>
    %24 = vector.extract_strided_slice %22 {offsets = [0, 1, 0], sizes = [6, 16, 4], strides = [1, 1, 1]} : vector<8x18x4xbf16> to vector<6x16x4xbf16>
    %25 = vector.extract_strided_slice %22 {offsets = [0, 2, 0], sizes = [6, 16, 4], strides = [1, 1, 1]} : vector<8x18x4xbf16> to vector<6x16x4xbf16>
    %26 = vector.extract_strided_slice %22 {offsets = [1, 0, 0], sizes = [6, 16, 4], strides = [1, 1, 1]} : vector<8x18x4xbf16> to vector<6x16x4xbf16>
    %27 = vector.extract_strided_slice %22 {offsets = [1, 1, 0], sizes = [6, 16, 4], strides = [1, 1, 1]} : vector<8x18x4xbf16> to vector<6x16x4xbf16>
    %28 = vector.extract_strided_slice %22 {offsets = [1, 2, 0], sizes = [6, 16, 4], strides = [1, 1, 1]} : vector<8x18x4xbf16> to vector<6x16x4xbf16>
    %29 = vector.extract_strided_slice %22 {offsets = [2, 0, 0], sizes = [6, 16, 4], strides = [1, 1, 1]} : vector<8x18x4xbf16> to vector<6x16x4xbf16>
    %30 = vector.extract_strided_slice %22 {offsets = [2, 1, 0], sizes = [6, 16, 4], strides = [1, 1, 1]} : vector<8x18x4xbf16> to vector<6x16x4xbf16>
    %31 = vector.extract_strided_slice %22 {offsets = [2, 2, 0], sizes = [6, 16, 4], strides = [1, 1, 1]} : vector<8x18x4xbf16> to vector<6x16x4xbf16>
    %32 = tpu.concatenate %23, %24, %25, %26, %27, %28, %29, %30, %31 in 2 : vector<6x16x4xbf16>, vector<6x16x4xbf16>, vector<6x16x4xbf16>, vector<6x16x4xbf16>, vector<6x16x4xbf16>, vector<6x16x4xbf16>, vector<6x16x4xbf16>, vector<6x16x4xbf16>, vector<6x16x4xbf16> -> vector<6x16x36xbf16>
    %33 = vector.shape_cast %32 : vector<6x16x36xbf16> to vector<96x36xbf16>
    %c0_12 = arith.constant 0 : index
    %c0_13 = arith.constant 0 : index
    %34 = vector.load %arg5[%c0_12, %c0_13] : memref<36x8xbf16, #tpu.memory_space<vmem>>, vector<36x8xbf16>
    %cst_14 = arith.constant dense<0.000000e+00> : vector<96x8xf32>
    %35 = tpu.matmul %33, %34, %cst_14 {dimension_numbers = #tpu.dot_dimension_numbers<[1], [0], [0], [1], [0, 0, 1, 1], [], []>} : vector<96x36xbf16>, vector<36x8xbf16>, vector<96x8xf32> -> vector<96x8xf32>
    %c0_15 = arith.constant 0 : index
    %c0_16 = arith.constant 0 : index
    %36 = vector.load %arg6[%c0_15, %c0_16] : memref<1x8xf32, #tpu.memory_space<vmem>>, vector<1x8xf32>
    %37 = vector.broadcast %36 : vector<1x8xf32> to vector<96x8xf32>
    %38 = arith.addf %35, %37 : vector<96x8xf32>
    %cst_17 = arith.constant 0.000000e+00 : f32
    %39 = vector.broadcast %cst_17 : f32 to vector<96x8xf32>
    %40 = arith.maximumf %38, %39 : vector<96x8xf32>
    %41 = vector.shape_cast %40 : vector<96x8xf32> to vector<6x16x8xf32>
    %42 = arith.truncf %41 : vector<6x16x8xf32> to vector<6x16x8xbf16>
    %43 = tpu.iota {dimensions = array<i32: 0>} : vector<6x1x1xi32>
    %c1_i32 = arith.constant 1 : i32
    %44 = arith.subi %0, %c1_i32 : i32
    %45 = vector.broadcast %44 : i32 to vector<6x1x1xi32>
    %46 = arith.addi %43, %45 : vector<6x1x1xi32>
    %c0_i32_18 = arith.constant 0 : i32
    %47 = vector.broadcast %c0_i32_18 : i32 to vector<6x1x1xi32>
    %48 = arith.cmpi sge, %46, %47 : vector<6x1x1xi32>
    %c16_i32_19 = arith.constant 16 : i32
    %49 = vector.broadcast %c16_i32_19 : i32 to vector<6x1x1xi32>
    %50 = arith.cmpi slt, %46, %49 : vector<6x1x1xi32>
    %51 = arith.andi %48, %50 : vector<6x1x1xi1>
    %cst_20 = arith.constant 0.000000e+00 : bf16
    %52 = vector.broadcast %cst_20 : bf16 to vector<6x16x8xbf16>
    %53 = vector.shape_cast %51 : vector<6x1x1xi1> to vector<6x1x1xi1>
    %54 = vector.broadcast %53 : vector<6x1x1xi1> to vector<6x16x8xi1>
    %55 = arith.select %54, %42, %52 : vector<6x16x8xi1>, vector<6x16x8xbf16>
    %cst_21 = arith.constant 0.000000e+00 : bf16
    %56 = vector.broadcast %cst_21 : bf16 to vector<6x1x8xbf16>
    %57 = tpu.concatenate %56, %55, %56 in 1 : vector<6x1x8xbf16>, vector<6x16x8xbf16>, vector<6x1x8xbf16> -> vector<6x18x8xbf16>
    %58 = vector.extract_strided_slice %57 {offsets = [0, 0, 0], sizes = [4, 16, 8], strides = [1, 1, 1]} : vector<6x18x8xbf16> to vector<4x16x8xbf16>
    %59 = vector.extract_strided_slice %57 {offsets = [0, 1, 0], sizes = [4, 16, 8], strides = [1, 1, 1]} : vector<6x18x8xbf16> to vector<4x16x8xbf16>
    %60 = vector.extract_strided_slice %57 {offsets = [0, 2, 0], sizes = [4, 16, 8], strides = [1, 1, 1]} : vector<6x18x8xbf16> to vector<4x16x8xbf16>
    %61 = vector.extract_strided_slice %57 {offsets = [1, 0, 0], sizes = [4, 16, 8], strides = [1, 1, 1]} : vector<6x18x8xbf16> to vector<4x16x8xbf16>
    %62 = vector.extract_strided_slice %57 {offsets = [1, 1, 0], sizes = [4, 16, 8], strides = [1, 1, 1]} : vector<6x18x8xbf16> to vector<4x16x8xbf16>
    %63 = vector.extract_strided_slice %57 {offsets = [1, 2, 0], sizes = [4, 16, 8], strides = [1, 1, 1]} : vector<6x18x8xbf16> to vector<4x16x8xbf16>
    %64 = vector.extract_strided_slice %57 {offsets = [2, 0, 0], sizes = [4, 16, 8], strides = [1, 1, 1]} : vector<6x18x8xbf16> to vector<4x16x8xbf16>
    %65 = vector.extract_strided_slice %57 {offsets = [2, 1, 0], sizes = [4, 16, 8], strides = [1, 1, 1]} : vector<6x18x8xbf16> to vector<4x16x8xbf16>
    %66 = vector.extract_strided_slice %57 {offsets = [2, 2, 0], sizes = [4, 16, 8], strides = [1, 1, 1]} : vector<6x18x8xbf16> to vector<4x16x8xbf16>
    %67 = tpu.concatenate %58, %59, %60, %61, %62, %63, %64, %65, %66 in 2 : vector<4x16x8xbf16>, vector<4x16x8xbf16>, vector<4x16x8xbf16>, vector<4x16x8xbf16>, vector<4x16x8xbf16>, vector<4x16x8xbf16>, vector<4x16x8xbf16>, vector<4x16x8xbf16>, vector<4x16x8xbf16> -> vector<4x16x72xbf16>
    %68 = vector.shape_cast %67 : vector<4x16x72xbf16> to vector<64x72xbf16>
    %c0_22 = arith.constant 0 : index
    %c0_23 = arith.constant 0 : index
    %69 = vector.load %arg7[%c0_22, %c0_23] : memref<72x8xbf16, #tpu.memory_space<vmem>>, vector<72x8xbf16>
    %cst_24 = arith.constant dense<0.000000e+00> : vector<64x8xf32>
    %70 = tpu.matmul %68, %69, %cst_24 {dimension_numbers = #tpu.dot_dimension_numbers<[1], [0], [0], [1], [0, 0, 1, 1], [], []>} : vector<64x72xbf16>, vector<72x8xbf16>, vector<64x8xf32> -> vector<64x8xf32>
    %c0_25 = arith.constant 0 : index
    %c0_26 = arith.constant 0 : index
    %71 = vector.load %arg8[%c0_25, %c0_26] : memref<1x8xf32, #tpu.memory_space<vmem>>, vector<1x8xf32>
    %72 = vector.broadcast %71 : vector<1x8xf32> to vector<64x8xf32>
    %73 = arith.addf %70, %72 : vector<64x8xf32>
    %cst_27 = arith.constant 0.000000e+00 : f32
    %74 = vector.broadcast %cst_27 : f32 to vector<64x8xf32>
    %75 = arith.maximumf %73, %74 : vector<64x8xf32>
    %76 = vector.shape_cast %75 : vector<64x8xf32> to vector<4x16x8xf32>
    %c0_28 = arith.constant 0 : index
    %c0_29 = arith.constant 0 : index
    %c0_30 = arith.constant 0 : index
    %c0_31 = arith.constant 0 : index
    %77 = vector.load %arg9[%c0_28, %c0_29, %c0_30, %c0_31] : memref<1x4x16x8xf32, #tpu.memory_space<vmem>>, vector<1x4x16x8xf32>
    %78 = vector.shape_cast %77 : vector<1x4x16x8xf32> to vector<4x16x8xf32>
    %79 = vector.shape_cast %76 : vector<4x16x8xf32> to vector<1x4x16x8xf32>
    tpu.vector_store %arg9[%c0_28, %c0_29, %c0_30, %c0_31], %79 {strides = array<i32>} : memref<1x4x16x8xf32, #tpu.memory_space<vmem>>, vector<1x4x16x8xf32>,
    %80 = vector.shape_cast %76 : vector<4x16x8xf32> to vector<2x2x16x8xf32>
    %81 = vector.extract_strided_slice %80 {offsets = [0, 0, 0, 0], sizes = [2, 1, 16, 8], strides = [1, 1, 1, 1]} : vector<2x2x16x8xf32> to vector<2x1x16x8xf32>
    %82 = vector.shape_cast %81 : vector<2x1x16x8xf32> to vector<2x16x8xf32>
    %83 = vector.extract_strided_slice %80 {offsets = [0, 1, 0, 0], sizes = [2, 1, 16, 8], strides = [1, 1, 1, 1]} : vector<2x2x16x8xf32> to vector<2x1x16x8xf32>
    %84 = vector.shape_cast %83 : vector<2x1x16x8xf32> to vector<2x16x8xf32>
    %85 = arith.maximumf %82, %84 : vector<2x16x8xf32>
    %86 = vector.shape_cast %85 : vector<2x16x8xf32> to vector<32x8xf32>
    %c0_32 = arith.constant 0 : index
    %c0_33 = arith.constant 0 : index
    %87 = vector.load %arg11[%c0_32, %c0_33] : memref<32x8xf32, #tpu.memory_space<vmem>>, vector<32x8xf32>
    tpu.vector_store %arg11[%c0_32, %c0_33], %86 {strides = array<i32>} : memref<32x8xf32, #tpu.memory_space<vmem>>, vector<32x8xf32>,
    %c0_34 = arith.constant 0 : index
    %c0_35 = arith.constant 0 : index
    %88 = tpu.strided_load %arg11[%c0_34, %c0_35] {strides = array<i32: 2, 1>} : memref<32x8xf32, #tpu.memory_space<vmem>>, vector<16x8xf32>
    %c1 = arith.constant 1 : index
    %c0_36 = arith.constant 0 : index
    %89 = tpu.strided_load %arg11[%c1, %c0_36] {strides = array<i32: 2, 1>} : memref<32x8xf32, #tpu.memory_space<vmem>>, vector<16x8xf32>
    %90 = arith.maximumf %88, %89 : vector<16x8xf32>
    %91 = vector.shape_cast %90 : vector<16x8xf32> to vector<2x8x8xf32>
    %c0_37 = arith.constant 0 : index
    %c0_38 = arith.constant 0 : index
    %c0_39 = arith.constant 0 : index
    %c0_40 = arith.constant 0 : index
    %92 = vector.load %arg10[%c0_37, %c0_38, %c0_39, %c0_40] : memref<1x2x8x8xf32, #tpu.memory_space<vmem>>, vector<1x2x8x8xf32>
    %93 = vector.shape_cast %92 : vector<1x2x8x8xf32> to vector<2x8x8xf32>
    %94 = vector.shape_cast %91 : vector<2x8x8xf32> to vector<1x2x8x8xf32>
    tpu.vector_store %arg10[%c0_37, %c0_38, %c0_39, %c0_40], %94 {strides = array<i32>} : memref<1x2x8x8xf32, #tpu.memory_space<vmem>>, vector<1x2x8x8xf32>,
    return
  }
  func.func @transform_0(%arg0: i32, %arg1: i32) -> (i32, i32, i32, i32) {
    %c0_i32 = arith.constant 0 : i32
    %c0_i32_0 = arith.constant 0 : i32
    %c0_i32_1 = arith.constant 0 : i32
    return %arg0, %arg1, %c0_i32, %c0_i32_0 : i32, i32, i32, i32
  }
  func.func @transform_1(%arg0: i32, %arg1: i32) -> (i32, i32, i32, i32) {
    %c2_i32 = arith.constant 2 : i32
    %0 = arith.muli %arg1, %c2_i32 : i32
    %c1_i32 = arith.constant 1 : i32
    %1 = arith.subi %0, %c1_i32 : i32
    %c0_i32 = arith.constant 0 : i32
    %2 = arith.maxsi %1, %c0_i32 : i32
    %c0_i32_0 = arith.constant 0 : i32
    %c0_i32_1 = arith.constant 0 : i32
    %c0_i32_2 = arith.constant 0 : i32
    return %arg0, %2, %c0_i32_0, %c0_i32_1 : i32, i32, i32, i32
  }
  func.func @transform_2(%arg0: i32, %arg1: i32) -> (i32, i32, i32, i32) {
    %c1_i32 = arith.constant 1 : i32
    %0 = arith.addi %arg1, %c1_i32 : i32
    %c2_i32 = arith.constant 2 : i32
    %1 = arith.muli %0, %c2_i32 : i32
    %c7_i32 = arith.constant 7 : i32
    %2 = arith.minsi %1, %c7_i32 : i32
    %c0_i32 = arith.constant 0 : i32
    %c0_i32_0 = arith.constant 0 : i32
    %c0_i32_1 = arith.constant 0 : i32
    return %arg0, %2, %c0_i32, %c0_i32_0 : i32, i32, i32, i32
  }
  func.func @transform_3(%arg0: i32, %arg1: i32) -> (i32, i32) {
    %c0_i32 = arith.constant 0 : i32
    %c0_i32_0 = arith.constant 0 : i32
    %c0_i32_1 = arith.constant 0 : i32
    return %c0_i32, %c0_i32_0 : i32, i32
  }
  func.func @transform_4(%arg0: i32, %arg1: i32) -> (i32, i32) {
    %c0_i32 = arith.constant 0 : i32
    %c0_i32_0 = arith.constant 0 : i32
    %c0_i32_1 = arith.constant 0 : i32
    return %c0_i32, %c0_i32_0 : i32, i32
  }
  func.func @transform_5(%arg0: i32, %arg1: i32) -> (i32, i32) {
    %c0_i32 = arith.constant 0 : i32
    %c0_i32_0 = arith.constant 0 : i32
    %c0_i32_1 = arith.constant 0 : i32
    return %c0_i32, %c0_i32_0 : i32, i32
  }
  func.func @transform_6(%arg0: i32, %arg1: i32) -> (i32, i32) {
    %c0_i32 = arith.constant 0 : i32
    %c0_i32_0 = arith.constant 0 : i32
    %c0_i32_1 = arith.constant 0 : i32
    return %c0_i32, %c0_i32_0 : i32, i32
  }
  func.func @transform_7(%arg0: i32, %arg1: i32) -> (i32, i32, i32, i32) {
    %c0_i32 = arith.constant 0 : i32
    %c0_i32_0 = arith.constant 0 : i32
    %c0_i32_1 = arith.constant 0 : i32
    return %arg0, %arg1, %c0_i32, %c0_i32_0 : i32, i32, i32, i32
  }
  func.func @transform_8(%arg0: i32, %arg1: i32) -> (i32, i32, i32, i32) {
    %c0_i32 = arith.constant 0 : i32
    %c0_i32_0 = arith.constant 0 : i32
    %c0_i32_1 = arith.constant 0 : i32
    return %arg0, %arg1, %c0_i32, %c0_i32_0 : i32, i32, i32, i32
  }
}

</mosaic_0001>

<llo_original>
// kernel: tpu_custom_call.1
$region0: #{tpu_custom_call.1}
  #allocation0 [shape = 'u32[]', space=smem, size = 0x4, offset = 0x4, fixed_abs, tag = 'smem constant byte address 0x4 - core index']
  #allocation1 [shape = 'u32[72,128]{1,0:T(1,128)}', space=vmem, size = 0x9000, scoped, tag = 'internal scratch']
  #allocation2 [shape = 'f32[32,8]{1,0:T(8,128)}', space=vmem, size = 0x4000, scoped, tag = 'scratch operand']
  %s0 = inlined_call_operand.vmem [shape: bf16[2,16,16,4], index: 0, kind: input, shape index: {}]
  %s1 = inlined_call_operand.vmem [shape: bf16[2,16,16,4], index: 1, kind: input, shape index: {}]
  %s2 = inlined_call_operand.vmem [shape: bf16[2,16,16,4], index: 2, kind: input, shape index: {}]
  %s3 = inlined_call_operand.vmem [shape: bf16[36,8], index: 3, kind: input, shape index: {}]
  %s4 = inlined_call_operand.vmem [shape: f32[1,8], index: 4, kind: input, shape index: {}]
  %s5 = inlined_call_operand.vmem [shape: bf16[72,8], index: 5, kind: input, shape index: {}]
  %s6 = inlined_call_operand.vmem [shape: f32[1,8], index: 6, kind: input, shape index: {}]
  %s7 = inlined_call_operand.vmem [shape: f32[2,16,16,8], index: 7, kind: output, shape index: {0}]
  %s8 = inlined_call_operand.hbm [shape: f32[2,8,8,8], index: 8, kind: output, shape index: {1}]
  %9 = xla_tuple %s7, %s8
  %s10 = sld [smem:[#allocation0]]
  $region69: #{tpu_custom_call.1} parent=0
    _
  %s12 = ssub.s32 1, %s10
  %s13 = scalar_select 0, %s12, %s10
  $region1: #{tpu_custom_call.1} parent=0
    #allocation3 [shape = 'u8[16384]{0}', space=vmem, size = 0x4000, scoped, tag = 'output window, operand 1']
    #allocation4 [shape = 's32[2]{0}', space=sflag, size = 0x8, scoped, tag = 'scoped memory for tpu_custom_call.1']
    %14 = vsyncpa [#allocation4], 0
    %s15 = scalar_lea.sflag [#allocation4], 1
    %16 = vsyncpa %s15, 0
    loop: start=0, step=1, limit=10
    $region2: #{tpu_custom_call.1} parent=1 // loop_pre_header
      _
    $region3: #{tpu_custom_call.1} parent=1 // loop_header
      %s18 = sphi 0, %s22
      %p19 = scmp.ge.s32.totalorder %s18, 10
      %s25 = sphi 0, %s37
      %s26 = sphi 0, %s33
      %s27 = sphi 0, %s25
      %s28 = sphi 0, %s26
      %s29 = sphi 0, %s27
      %s30 = sphi 0, %s28
      %s42 = sphi 0, %s44
      %s45 = sphi 0, %s42
      %s46 = sphi 0, %s45
      %s62 = sphi 0, %s46
      %s78 = sphi 0, %s80
      %s81 = sphi 0, %s78
      %s82 = sphi 0, %s81
      %s98 = sphi 0, %s82
      %s114 = sphi 0, %s116
      %s117 = sphi 0, %s114
      %s118 = sphi 0, %s117
      %s134 = sphi 0, %s118
      %s138 = sphi 0, %s138
      %s140 = sphi 0, %s138
      %s141 = sphi 0, %s140
      %s155 = sphi 0, %s141
      %s159 = sphi 0, %s159
      %s161 = sphi 0, %s159
      %s162 = sphi 0, %s161
      %s176 = sphi 0, %s162
      %s180 = sphi 0, %s180
      %s182 = sphi 0, %s180
      %s183 = sphi 0, %s182
      %s197 = sphi 0, %s183
      %s201 = sphi 0, %s201
      %s203 = sphi 0, %s201
      %s204 = sphi 0, %s203
      %s218 = sphi 0, %s204
      %s226 = sphi 0, %s228
      %s229 = sphi 0, %s226
      %s230 = sphi 0, %s229
      %s246 = sphi 0, %s230
      %s254 = sphi 0, %s256
      %s257 = sphi 0, %s254
      %s258 = sphi 0, %s257
      %s274 = sphi 0, %s258
    $region4: #{tpu_custom_call.1} parent=1 // loop_header_branch
      %21 = sbr.rel (%p19) target = $region8
    $region5: #{tpu_custom_call.1} parent=1 // loop_body
      %s23 = ssub.s32 %s18, 1
      %s24 = ssub.s32 %s18, 2
      %s31 = sadd.s32 1, %s26
      %p32 = scmp.ge.s32.totalorder %s31, 4
      %s33 = scalar_select %p32, 0, %s31
      %s34 = sadd.s32 1, %s25
      %s35 = scalar_select %p32, %s34, %s25
      %p36 = scmp.ge.s32.totalorder %s35, 2
      %s37 = scalar_select %p36, 0, %s35
      %s38 = ssub.s32 %s25, %s37
      %s39 = ssub.s32 %s26, %s33
      %s40 = sor.u32 %s38, %s39
      %p41 = scmp.eq.s32.totalorder %s40, 0
      %s43 = sadd.s32 %s42, 1
      %s44 = scalar_select %p41, %s42, %s43
      %p47 = pneg %p41
      %p48 = scmp.eq.s32.totalorder %s18, 7
      %p49 = por %p47, %p48
      %p50 = scmp.ne.s32.totalorder %s42, %s45
      %p51 = scmp.eq.s32.totalorder %s18, 0
      %p52 = por %p50, %p51
      %p53 = scmp.ne.s32.totalorder %s42, %s45
      %p54 = scmp.eq.s32.totalorder %s23, 7
      %p55 = por %p53, %p54
      %p56 = scmp.ne.s32.totalorder %s45, %s46
      %p57 = scmp.eq.s32.totalorder %s23, 0
      %p58 = por %p56, %p57
      %p59 = scmp.ne.s32.totalorder %s45, %s46
      %p60 = scmp.eq.s32.totalorder %s24, 7
      %p61 = por %p59, %p60
      %p63 = scmp.ne.s32.totalorder %s46, %s62
      %p64 = scmp.eq.s32.totalorder %s24, 0
      %p65 = por %p63, %p64
      %s66 = smul.u32 %s26, 2
      %s67 = ssub.s32 %s66, 1
      %p68 = scmp.gt.s32.totalorder %s67, 0
      %s69 = scalar_select %p68, %s67, 0
      %s70 = smul.u32 %s33, 2
      %s71 = ssub.s32 %s70, 1
      %p72 = scmp.gt.s32.totalorder %s71, 0
      %s73 = scalar_select %p72, %s71, 0
      %s74 = ssub.s32 %s25, %s37
      %s75 = ssub.s32 %s69, %s73
      %s76 = sor.u32 %s74, %s75
      %p77 = scmp.eq.s32.totalorder %s76, 0
      %s79 = sadd.s32 %s78, 1
      %s80 = scalar_select %p77, %s78, %s79
      %p83 = pneg %p77
      %p84 = scmp.eq.s32.totalorder %s18, 7
      %p85 = por %p83, %p84
      %p86 = scmp.ne.s32.totalorder %s78, %s81
      %p87 = scmp.eq.s32.totalorder %s18, 0
      %p88 = por %p86, %p87
      %p89 = scmp.ne.s32.totalorder %s78, %s81
      %p90 = scmp.eq.s32.totalorder %s23, 7
      %p91 = por %p89, %p90
      %p92 = scmp.ne.s32.totalorder %s81, %s82
      %p93 = scmp.eq.s32.totalorder %s23, 0
      %p94 = por %p92, %p93
      %p95 = scmp.ne.s32.totalorder %s81, %s82
      %p96 = scmp.eq.s32.totalorder %s24, 7
      %p97 = por %p95, %p96
      %p99 = scmp.ne.s32.totalorder %s82, %s98
      %p100 = scmp.eq.s32.totalorder %s24, 0
      %p101 = por %p99, %p100
      %s102 = sadd.s32 %s26, 1
      %s103 = smul.u32 %s102, 2
      %p104 = scmp.lt.s32.totalorder %s103, 7
      %s105 = scalar_select %p104, %s103, 7
      %s106 = sadd.s32 %s33, 1
      %s107 = smul.u32 %s106, 2
      %p108 = scmp.lt.s32.totalorder %s107, 7
      %s109 = scalar_select %p108, %s107, 7
      %s110 = ssub.s32 %s25, %s37
      %s111 = ssub.s32 %s105, %s109
      %s112 = sor.u32 %s110, %s111
      %p113 = scmp.eq.s32.totalorder %s112, 0
      %s115 = sadd.s32 %s114, 1
      %s116 = scalar_select %p113, %s114, %s115
      %p119 = pneg %p113
      %p120 = scmp.eq.s32.totalorder %s18, 7
      %p121 = por %p119, %p120
      %p122 = scmp.ne.s32.totalorder %s114, %s117
      %p123 = scmp.eq.s32.totalorder %s18, 0
      %p124 = por %p122, %p123
      %p125 = scmp.ne.s32.totalorder %s114, %s117
      %p126 = scmp.eq.s32.totalorder %s23, 7
      %p127 = por %p125, %p126
      %p128 = scmp.ne.s32.totalorder %s117, %s118
      %p129 = scmp.eq.s32.totalorder %s23, 0
      %p130 = por %p128, %p129
      %p131 = scmp.ne.s32.totalorder %s117, %s118
      %p132 = scmp.eq.s32.totalorder %s24, 7
      %p133 = por %p131, %p132
      %p135 = scmp.ne.s32.totalorder %s118, %s134
      %p136 = scmp.eq.s32.totalorder %s24, 0
      %p137 = por %p135, %p136
      %s139 = sadd.s32 %s138, 1
      %p142 = scmp.eq.s32.totalorder %s18, 7
      %p143 = scmp.ne.s32.totalorder %s138, %s140
      %p144 = scmp.eq.s32.totalorder %s18, 0
      %p145 = por %p143, %p144
      %p146 = scmp.ne.s32.totalorder %s138, %s140
      %p147 = scmp.eq.s32.totalorder %s23, 7
      %p148 = por %p146, %p147
      %p149 = scmp.ne.s32.totalorder %s140, %s141
      %p150 = scmp.eq.s32.totalorder %s23, 0
      %p151 = por %p149, %p150
      %p152 = scmp.ne.s32.totalorder %s140, %s141
      %p153 = scmp.eq.s32.totalorder %s24, 7
      %p154 = por %p152, %p153
      %p156 = scmp.ne.s32.totalorder %s141, %s155
      %p157 = scmp.eq.s32.totalorder %s24, 0
      %p158 = por %p156, %p157
      %s160 = sadd.s32 %s159, 1
      %p163 = scmp.eq.s32.totalorder %s18, 7
      %p164 = scmp.ne.s32.totalorder %s159, %s161
      %p165 = scmp.eq.s32.totalorder %s18, 0
      %p166 = por %p164, %p165
      %p167 = scmp.ne.s32.totalorder %s159, %s161
      %p168 = scmp.eq.s32.totalorder %s23, 7
      %p169 = por %p167, %p168
      %p170 = scmp.ne.s32.totalorder %s161, %s162
      %p171 = scmp.eq.s32.totalorder %s23, 0
      %p172 = por %p170, %p171
      %p173 = scmp.ne.s32.totalorder %s161, %s162
      %p174 = scmp.eq.s32.totalorder %s24, 7
      %p175 = por %p173, %p174
      %p177 = scmp.ne.s32.totalorder %s162, %s176
      %p178 = scmp.eq.s32.totalorder %s24, 0
      %p179 = por %p177, %p178
      %s181 = sadd.s32 %s180, 1
      %p184 = scmp.eq.s32.totalorder %s18, 7
      %p185 = scmp.ne.s32.totalorder %s180, %s182
      %p186 = scmp.eq.s32.totalorder %s18, 0
      %p187 = por %p185, %p186
      %p188 = scmp.ne.s32.totalorder %s180, %s182
      %p189 = scmp.eq.s32.totalorder %s23, 7
      %p190 = por %p188, %p189
      %p191 = scmp.ne.s32.totalorder %s182, %s183
      %p192 = scmp.eq.s32.totalorder %s23, 0
      %p193 = por %p191, %p192
      %p194 = scmp.ne.s32.totalorder %s182, %s183
      %p195 = scmp.eq.s32.totalorder %s24, 7
      %p196 = por %p194, %p195
      %p198 = scmp.ne.s32.totalorder %s183, %s197
      %p199 = scmp.eq.s32.totalorder %s24, 0
      %p200 = por %p198, %p199
      %s202 = sadd.s32 %s201, 1
      %p205 = scmp.eq.s32.totalorder %s18, 7
      %p206 = scmp.ne.s32.totalorder %s201, %s203
      %p207 = scmp.eq.s32.totalorder %s18, 0
      %p208 = por %p206, %p207
      %p209 = scmp.ne.s32.totalorder %s201, %s203
      %p210 = scmp.eq.s32.totalorder %s23, 7
      %p211 = por %p209, %p210
      %p212 = scmp.ne.s32.totalorder %s203, %s204
      %p213 = scmp.eq.s32.totalorder %s23, 0
      %p214 = por %p212, %p213
      %p215 = scmp.ne.s32.totalorder %s203, %s204
      %p216 = scmp.eq.s32.totalorder %s24, 7
      %p217 = por %p215, %p216
      %p219 = scmp.ne.s32.totalorder %s204, %s218
      %p220 = scmp.eq.s32.totalorder %s24, 0
      %p221 = por %p219, %p220
      %s222 = ssub.s32 %s25, %s37
      %s223 = ssub.s32 %s26, %s33
      %s224 = sor.u32 %s222, %s223
      %p225 = scmp.eq.s32.totalorder %s224, 0
      %s227 = sadd.s32 %s226, 1
      %s228 = scalar_select %p225, %s226, %s227
      %p231 = pneg %p225
      %p232 = scmp.eq.s32.totalorder %s18, 7
      %p233 = por %p231, %p232
      %p234 = scmp.ne.s32.totalorder %s226, %s229
      %p235 = scmp.eq.s32.totalorder %s18, 0
      %p236 = por %p234, %p235
      %p237 = scmp.ne.s32.totalorder %s226, %s229
      %p238 = scmp.eq.s32.totalorder %s23, 7
      %p239 = por %p237, %p238
      %p240 = scmp.ne.s32.totalorder %s229, %s230
      %p241 = scmp.eq.s32.totalorder %s23, 0
      %p242 = por %p240, %p241
      %p243 = scmp.ne.s32.totalorder %s229, %s230
      %p244 = scmp.eq.s32.totalorder %s24, 7
      %p245 = por %p243, %p244
      %p247 = scmp.ne.s32.totalorder %s230, %s246
      %p248 = scmp.eq.s32.totalorder %s24, 0
      %p249 = por %p247, %p248
      %s250 = ssub.s32 %s25, %s37
      %s251 = ssub.s32 %s26, %s33
      %s252 = sor.u32 %s250, %s251
      %p253 = scmp.eq.s32.totalorder %s252, 0
      %s255 = sadd.s32 %s254, 1
      %s256 = scalar_select %p253, %s254, %s255
      %p259 = pneg %p253
      %p260 = scmp.eq.s32.totalorder %s18, 7
      %p261 = por %p259, %p260
      %p262 = scmp.ne.s32.totalorder %s254, %s257
      %p263 = scmp.eq.s32.totalorder %s18, 0
      %p264 = por %p262, %p263
      %p265 = scmp.ne.s32.totalorder %s254, %s257
      %p266 = scmp.eq.s32.totalorder %s23, 7
      %p267 = por %p265, %p266
      %p268 = scmp.ne.s32.totalorder %s257, %s258
      %p269 = scmp.eq.s32.totalorder %s23, 0
      %p270 = por %p268, %p269
      %p271 = scmp.ne.s32.totalorder %s257, %s258
      %p272 = scmp.eq.s32.totalorder %s24, 7
      %p273 = por %p271, %p272
      %p275 = scmp.ne.s32.totalorder %s258, %s274
      %p276 = scmp.eq.s32.totalorder %s24, 0
      %p277 = por %p275, %p276
      %p278 = scmp.le.s32.totalorder 1, %s18
      %p279 = scmp.lt.s32.totalorder %s18, 9
      %p280 = pnand %p278, %p279
      %p281 = pneg %p280
      // Predicated region
      $region9: #{tpu_custom_call.1} parent=5 // pred_check
        _
      $region10: #{tpu_custom_call.1} parent=5 // pred_check_branch
        %283 = sbr.rel (%p280) target = $region12
      $region11: #{tpu_custom_call.1} parent=5 // pred_region
        %s284 = ssub.s32 %s18, 1
        // Predicated region
        $region13: #{tpu_custom_call.1} parent=11 // pred_check
          %p285 = pneg %p151
        $region14: #{tpu_custom_call.1} parent=11 // pred_check_branch
          %287 = sbr.rel (%p285) target = $region16
        $region15: #{tpu_custom_call.1} parent=11 // pred_region
          _
        $region16: #{tpu_custom_call.1} parent=11 // pred_fallthru
          _
        // Predicated region
        $region17: #{tpu_custom_call.1} parent=11 // pred_check
          %p288 = pneg %p172
        $region18: #{tpu_custom_call.1} parent=11 // pred_check_branch
          %290 = sbr.rel (%p288) target = $region20
        $region19: #{tpu_custom_call.1} parent=11 // pred_region
          _
        $region20: #{tpu_custom_call.1} parent=11 // pred_fallthru
          _
        // Predicated region
        $region21: #{tpu_custom_call.1} parent=11 // pred_check
          %p291 = pneg %p193
        $region22: #{tpu_custom_call.1} parent=11 // pred_check_branch
          %293 = sbr.rel (%p291) target = $region24
        $region23: #{tpu_custom_call.1} parent=11 // pred_region
          _
        $region24: #{tpu_custom_call.1} parent=11 // pred_fallthru
          _
        // Predicated region
        $region25: #{tpu_custom_call.1} parent=11 // pred_check
          %p294 = pneg %p214
        $region26: #{tpu_custom_call.1} parent=11 // pred_check_branch
          %296 = sbr.rel (%p294) target = $region28
        $region27: #{tpu_custom_call.1} parent=11 // pred_region
          _
        $region28: #{tpu_custom_call.1} parent=11 // pred_fallthru
          _
      $region12: #{tpu_custom_call.1} parent=5 // pred_fallthru
        _
      %p297 = scmp.lt.s32.totalorder %s18, 8
      // Predicated region
      $region29: #{tpu_custom_call.1} parent=5 // pred_check
        %p298 = pneg %p297
      $region30: #{tpu_custom_call.1} parent=5 // pred_check_branch
        %300 = sbr.rel (%p298) target = $region32
      $region31: #{tpu_custom_call.1} parent=5 // pred_region
        // Predicated region
        $region33: #{tpu_custom_call.1} parent=31 // pred_check
          %p301 = pneg %p52
        $region34: #{tpu_custom_call.1} parent=31 // pred_check_branch
          %303 = sbr.rel (%p301) target = $region36
        $region35: #{tpu_custom_call.1} parent=31 // pred_region
          %s304 = smul.u32 4, %s26
          %p305 = scmp.lt.s32.totalorder %s25, 1
          %s306 = scalar_select %p305, %s25, 1
          %p307 = scmp.lt.s32.totalorder %s304, 15
          %s308 = scalar_select %p307, %s304, 15
          %s309 = smul.addr %s308, 2
          %s310 = smul.addr %s306, 32
          %s311 = sadd.s32 %s309, %s310
          %s312 = smul.addr %s311, 4
          %s313 = scalar_lea.vmem %s0, %s312
          %s314 = smul.u32 4, %s26
        $region36: #{tpu_custom_call.1} parent=31 // pred_fallthru
          _
        // Predicated region
        $region37: #{tpu_custom_call.1} parent=31 // pred_check
          %p315 = pneg %p88
        $region38: #{tpu_custom_call.1} parent=31 // pred_check_branch
          %317 = sbr.rel (%p315) target = $region40
        $region39: #{tpu_custom_call.1} parent=31 // pred_region
          %s318 = smul.u32 %s26, 2
          %s319 = ssub.s32 %s318, 1
          %p320 = scmp.gt.s32.totalorder %s319, 0
          %s321 = scalar_select %p320, %s319, 0
          %s322 = smul.u32 2, %s321
          %p323 = scmp.lt.s32.totalorder %s25, 1
          %s324 = scalar_select %p323, %s25, 1
          %p325 = scmp.lt.s32.totalorder %s322, 15
          %s326 = scalar_select %p325, %s322, 15
          %s327 = smul.addr %s326, 2
          %s328 = smul.addr %s324, 32
          %s329 = sadd.s32 %s327, %s328
          %s330 = smul.addr %s329, 4
          %s331 = scalar_lea.vmem %s1, %s330
          %s332 = smul.u32 %s26, 2
          %s333 = ssub.s32 %s332, 1
          %p334 = scmp.gt.s32.totalorder %s333, 0
          %s335 = scalar_select %p334, %s333, 0
          %s336 = smul.u32 2, %s335
        $region40: #{tpu_custom_call.1} parent=31 // pred_fallthru
          _
        // Predicated region
        $region41: #{tpu_custom_call.1} parent=31 // pred_check
          %p337 = pneg %p124
        $region42: #{tpu_custom_call.1} parent=31 // pred_check_branch
          %339 = sbr.rel (%p337) target = $region44
        $region43: #{tpu_custom_call.1} parent=31 // pred_region
          %s340 = sadd.s32 %s26, 1
          %s341 = smul.u32 %s340, 2
          %p342 = scmp.lt.s32.totalorder %s341, 7
          %s343 = scalar_select %p342, %s341, 7
          %s344 = smul.u32 2, %s343
          %p345 = scmp.lt.s32.totalorder %s25, 1
          %s346 = scalar_select %p345, %s25, 1
          %p347 = scmp.lt.s32.totalorder %s344, 15
          %s348 = scalar_select %p347, %s344, 15
          %s349 = smul.addr %s348, 2
          %s350 = smul.addr %s346, 32
          %s351 = sadd.s32 %s349, %s350
          %s352 = smul.addr %s351, 4
          %s353 = scalar_lea.vmem %s2, %s352
          %s354 = sadd.s32 %s26, 1
          %s355 = smul.u32 %s354, 2
          %p356 = scmp.lt.s32.totalorder %s355, 7
          %s357 = scalar_select %p356, %s355, 7
          %s358 = smul.u32 2, %s357
        $region44: #{tpu_custom_call.1} parent=31 // pred_fallthru
          _
      $region32: #{tpu_custom_call.1} parent=5 // pred_fallthru
        _
      %p359 = scmp.le.s32.totalorder 1, %s18
      %p360 = scmp.lt.s32.totalorder %s18, 9
      %p361 = pnand %p359, %p360
      %p362 = pneg %p361
      // Predicated region
      $region45: #{tpu_custom_call.1} parent=5 // pred_check
        _
      $region46: #{tpu_custom_call.1} parent=5 // pred_check_branch
        %364 = sbr.rel (%p361) target = $region48
      $region47: #{tpu_custom_call.1} parent=5 // pred_region
        %s365 = ssub.s32 %s18, 1
        %s366 = smul.u32 4, %s28
        %p367 = scmp.lt.s32.totalorder %s27, 1
        %s368 = scalar_select %p367, %s27, 1
        %p369 = scmp.lt.s32.totalorder %s366, 15
        %s370 = scalar_select %p369, %s366, 15
        %s371 = smul.addr %s370, 2
        %s372 = smul.addr %s368, 32
        %s373 = sadd.s32 %s371, %s372
        %s374 = smul.addr %s373, 4
        %s375 = scalar_lea.vmem %s0, %s374
        %p376 = pneg %p58
        %p377 = pneg %p55
        %s378 = smul.u32 %s28, 2
        %s379 = ssub.s32 %s378, 1
        %p380 = scmp.gt.s32.totalorder %s379, 0
        %s381 = scalar_select %p380, %s379, 0
        %s382 = smul.u32 2, %s381
        %p383 = scmp.lt.s32.totalorder %s27, 1
        %s384 = scalar_select %p383, %s27, 1
        %p385 = scmp.lt.s32.totalorder %s382, 15
        %s386 = scalar_select %p385, %s382, 15
        %s387 = smul.addr %s386, 2
        %s388 = smul.addr %s384, 32
        %s389 = sadd.s32 %s387, %s388
        %s390 = smul.addr %s389, 4
        %s391 = scalar_lea.vmem %s1, %s390
        %p392 = pneg %p94
        %p393 = pneg %p91
        %s394 = sadd.s32 %s28, 1
        %s395 = smul.u32 %s394, 2
        %p396 = scmp.lt.s32.totalorder %s395, 7
        %s397 = scalar_select %p396, %s395, 7
        %s398 = smul.u32 2, %s397
        %p399 = scmp.lt.s32.totalorder %s27, 1
        %s400 = scalar_select %p399, %s27, 1
        %p401 = scmp.lt.s32.totalorder %s398, 15
        %s402 = scalar_select %p401, %s398, 15
        %s403 = smul.addr %s402, 2
        %s404 = smul.addr %s400, 32
        %s405 = sadd.s32 %s403, %s404
        %s406 = smul.addr %s405, 4
        %s407 = scalar_lea.vmem %s2, %s406
        %p408 = pneg %p130
        %p409 = pneg %p127
        %p410 = pneg %p151
        %p411 = pneg %p148
        %p412 = pneg %p172
        %p413 = pneg %p169
        %p414 = pneg %p193
        %p415 = pneg %p190
        %p416 = pneg %p214
        %p417 = pneg %p211
        %p418 = pneg %p242
        %p419 = pneg %p239
        %s420 = smul.u32 4, %s28
        %p421 = scmp.lt.s32.totalorder %s27, 1
        %s422 = scalar_select %p421, %s27, 1
        %p423 = scmp.lt.s32.totalorder %s420, 15
        %s424 = scalar_select %p423, %s420, 15
        %s425 = smul.addr %s424, 2
        %s426 = smul.addr %s422, 32
        %s427 = sadd.s32 %s425, %s426
        %s428 = smul.addr %s427, 8
        %s429 = scalar_lea.vmem %s7, %s428
        %p430 = pneg %p270
        %p431 = pneg %p267
        %s432 = sand.u32 %s257, 1
        %s433 = scalar_lea.sflag [#allocation4], %s432
        %s434 = sand.u32 %s257, 1
        %s435 = smul.addr %s434, 16
        %s436 = scalar_lea.vmem [#allocation3], %s435
        %s437 = smul.u32 4, %s28
        %p438 = scmp.lt.s32.totalorder %s27, 1
        %s439 = scalar_select %p438, %s27, 1
        %p440 = scmp.lt.s32.totalorder %s437, 15
        %s441 = scalar_select %p440, %s437, 15
        %s442 = smul.addr %s441, 2
        %s443 = smul.addr %s439, 32
        %s444 = sadd.s32 %s442, %s443
        %s445 = smul.addr %s444, 4
        %s446 = scalar_lea.vmem %s0, %s445
        %s447 = smul.u32 4, %s28
        %s448 = smul.u32 %s28, 2
        %s449 = ssub.s32 %s448, 1
        %p450 = scmp.gt.s32.totalorder %s449, 0
        %s451 = scalar_select %p450, %s449, 0
        %s452 = smul.u32 2, %s451
        %p453 = scmp.lt.s32.totalorder %s27, 1
        %s454 = scalar_select %p453, %s27, 1
        %p455 = scmp.lt.s32.totalorder %s452, 15
        %s456 = scalar_select %p455, %s452, 15
        %s457 = smul.addr %s456, 2
        %s458 = smul.addr %s454, 32
        %s459 = sadd.s32 %s457, %s458
        %s460 = smul.addr %s459, 4
        %s461 = scalar_lea.vmem %s1, %s460
        %s462 = smul.u32 %s28, 2
        %s463 = ssub.s32 %s462, 1
        %p464 = scmp.gt.s32.totalorder %s463, 0
        %s465 = scalar_select %p464, %s463, 0
        %s466 = smul.u32 2, %s465
        %s467 = sadd.s32 %s28, 1
        %s468 = smul.u32 %s467, 2
        %p469 = scmp.lt.s32.totalorder %s468, 7
        %s470 = scalar_select %p469, %s468, 7
        %s471 = smul.u32 2, %s470
        %p472 = scmp.lt.s32.totalorder %s27, 1
        %s473 = scalar_select %p472, %s27, 1
        %p474 = scmp.lt.s32.totalorder %s471, 15
        %s475 = scalar_select %p474, %s471, 15
        %s476 = smul.addr %s475, 2
        %s477 = smul.addr %s473, 32
        %s478 = sadd.s32 %s476, %s477
        %s479 = smul.addr %s478, 4
        %s480 = scalar_lea.vmem %s2, %s479
        %s481 = sadd.s32 %s28, 1
        %s482 = smul.u32 %s481, 2
        %p483 = scmp.lt.s32.totalorder %s482, 7
        %s484 = scalar_select %p483, %s482, 7
        %s485 = smul.u32 2, %s484
        %s486 = smul.u32 4, %s28
        %p487 = scmp.lt.s32.totalorder %s27, 1
        %s488 = scalar_select %p487, %s27, 1
        %p489 = scmp.lt.s32.totalorder %s486, 15
        %s490 = scalar_select %p489, %s486, 15
        %s491 = smul.addr %s490, 2
        %s492 = smul.addr %s488, 32
        %s493 = sadd.s32 %s491, %s492
        %s494 = smul.addr %s493, 8
        %s495 = scalar_lea.vmem %s7, %s494
        %s496 = smul.u32 4, %s28
        %s497 = smul.u32 2, %s28
        %s499 = smul.u32 %s28, 4
        %v500 = vld [vmem:[%s461] sm:$0xf]
        %v501 = vld [vmem:[%s461 + $0x4] sm:$0xf]
        %v502 = vld [vmem:[%s461 + $0x8] sm:$0xf]
        %v503 = vld [vmem:[%s461 + $0xc] sm:$0xf]
        %v504 = vld [vmem:[%s446] sm:$0xf]
        %v505 = vld [vmem:[%s446 + $0x4] sm:$0xf]
        %v506 = vld [vmem:[%s446 + $0x8] sm:$0xf]
        %v507 = vld [vmem:[%s446 + $0xc] sm:$0xf]
        %v508 = vld [vmem:[%s446 + $0x10] sm:$0xf]
        %v509 = vld [vmem:[%s446 + $0x14] sm:$0xf]
        %v510 = vld [vmem:[%s446 + $0x18] sm:$0xf]
        %v511 = vld [vmem:[%s446 + $0x1c] sm:$0xf]
        %v512 = vld [vmem:[%s480] sm:$0xf]
        %v513 = vld [vmem:[%s480 + $0x4] sm:$0xf]
        %v514 = vld [vmem:[%s480 + $0x8] sm:$0xf]
        %v515 = vld [vmem:[%s480 + $0xc] sm:$0xf]
        %s516 = ssub.s32 %s499, 2
        %v517 = vstv %s516
        %v518 = vadd.s32 %v517, 1
        %v519 = vadd.s32 %v517, 2
        %v520 = vadd.s32 %v517, 3
        %v521 = vadd.s32 %v517, 4
        %v522 = vadd.s32 %v517, 5
        %v523 = vadd.s32 %v517, 6
        %v524 = vadd.s32 %v517, 7
        %vm525 = vcmp.ge.s32.totalorder %v517, 0
        %vm526 = vcmp.ge.s32.totalorder %v518, 0
        %vm527 = vcmp.ge.s32.totalorder %v519, 0
        %vm528 = vcmp.ge.s32.totalorder %v520, 0
        %vm529 = vcmp.ge.s32.totalorder %v521, 0
        %vm530 = vcmp.ge.s32.totalorder %v522, 0
        %vm531 = vcmp.ge.s32.totalorder %v523, 0
        %vm532 = vcmp.ge.s32.totalorder %v524, 0
        %vm533 = vcmp.lt.s32.totalorder %v517, 16
        %vm534 = vcmp.lt.s32.totalorder %v518, 16
        %vm535 = vcmp.lt.s32.totalorder %v519, 16
        %vm536 = vcmp.lt.s32.totalorder %v520, 16
        %vm537 = vcmp.lt.s32.totalorder %v521, 16
        %vm538 = vcmp.lt.s32.totalorder %v522, 16
        %vm539 = vcmp.lt.s32.totalorder %v523, 16
        %vm540 = vcmp.lt.s32.totalorder %v524, 16
        %vm541 = vmand %vm525, %vm533
        %vm542 = vmand %vm526, %vm534
        %vm543 = vmand %vm527, %vm535
        %vm544 = vmand %vm528, %vm536
        %vm545 = vmand %vm529, %vm537
        %vm546 = vmand %vm530, %vm538
        %vm547 = vmand %vm531, %vm539
        %vm548 = vmand %vm532, %vm540
        %v549 = vsel %vm541, 1, 0
        %v550 = vsel %vm542, 1, 0
        %v551 = vsel %vm543, 1, 0
        %v552 = vsel %vm544, 1, 0
        %v553 = vsel %vm545, 1, 0
        %v554 = vsel %vm546, 1, 0
        %v555 = vsel %vm547, 1, 0
        %v556 = vsel %vm548, 1, 0
        %vm557 = vcmp.eq.s32.totalorder %v549, 1
        %vm558 = vcmp.eq.s32.totalorder %v550, 1
        %vm559 = vcmp.eq.s32.totalorder %v551, 1
        %vm560 = vcmp.eq.s32.totalorder %v552, 1
        %vm561 = vcmp.eq.s32.totalorder %v553, 1
        %vm562 = vcmp.eq.s32.totalorder %v554, 1
        %vm563 = vcmp.eq.s32.totalorder %v555, 1
        %vm564 = vcmp.eq.s32.totalorder %v556, 1
        %v565 = vsel %vm557, %v500, 0
        %v566 = vsel %vm557, %v501, 0
        %v567 = vsel %vm558, %v502, 0
        %v568 = vsel %vm558, %v503, 0
        %v569 = vsel %vm559, %v504, 0
        %v570 = vsel %vm559, %v505, 0
        %v571 = vsel %vm560, %v506, 0
        %v572 = vsel %vm560, %v507, 0
        %v573 = vsel %vm561, %v508, 0
        %v574 = vsel %vm561, %v509, 0
        %v575 = vsel %vm562, %v510, 0
        %v576 = vsel %vm562, %v511, 0
        %v577 = vsel %vm563, %v512, 0
        %v578 = vsel %vm563, %v513, 0
        %v579 = vsel %vm564, %v514, 0
        %v580 = vsel %vm564, %v515, 0
        %v597 = vunpack.c.l.b16 %v565
        %v598 = vunpack.c.l.b16 %v566
        %v599 = vunpack.c.l.b16 %v567
        %v600 = vunpack.c.l.b16 %v568
        %v601 = vunpack.c.l.b16 %v569
        %v602 = vunpack.c.l.b16 %v570
        %v603 = vunpack.c.l.b16 %v571
        %v604 = vunpack.c.l.b16 %v572
        %v605 = vunpack.c.l.b16 %v573
        %v606 = vunpack.c.l.b16 %v574
        %v607 = vunpack.c.l.b16 %v575
        %v608 = vunpack.c.l.b16 %v576
        %v609 = vunpack.c.l.b16 %v577
        %v610 = vunpack.c.l.b16 %v578
        %v611 = vunpack.c.l.b16 %v579
        %v612 = vunpack.c.l.b16 %v580
        %v613 = vpack.c.b16 %v598, %v597
        %v614 = vpack.c.b16 %v600, %v599
        %v615 = vpack.c.b16 %v602, %v601
        %v616 = vpack.c.b16 %v604, %v603
        %v617 = vpack.c.b16 %v606, %v605
        %v618 = vpack.c.b16 %v608, %v607
        %v619 = vpack.c.b16 %v610, %v609
        %v620 = vpack.c.b16 %v612, %v611
        %v622 = vshrl.u32 %v613, 16
        %v624 = vrot.slane %v622, 7
        %v625 = vshll.u32 %v613, 16
        %v627 = vor.u32 %v624, %v625
        %v629 = vshrl.u32 %v614, 16
        %v631 = vrot.slane %v629, 7
        %v632 = vshll.u32 %v614, 16
        %v634 = vor.u32 %v631, %v632
        %v636 = vshrl.u32 %v615, 16
        %v638 = vrot.slane %v636, 7
        %v639 = vshll.u32 %v615, 16
        %v641 = vor.u32 %v638, %v639
        %v643 = vshrl.u32 %v616, 16
        %v645 = vrot.slane %v643, 7
        %v646 = vshll.u32 %v616, 16
        %v648 = vor.u32 %v645, %v646
        %v650 = vshrl.u32 %v617, 16
        %v652 = vrot.slane %v650, 7
        %v653 = vshll.u32 %v617, 16
        %v655 = vor.u32 %v652, %v653
        %v657 = vshrl.u32 %v618, 16
        %v659 = vrot.slane %v657, 7
        %v660 = vshll.u32 %v618, 16
        %v662 = vor.u32 %v659, %v660
        %v664 = vshrl.u32 %v619, 16
        %v666 = vrot.slane %v664, 7
        %v667 = vshll.u32 %v619, 16
        %v669 = vor.u32 %v666, %v667
        %v671 = vshrl.u32 %v620, 16
        %v673 = vrot.slane %v671, 7
        %v674 = vshll.u32 %v620, 16
        %v676 = vor.u32 %v673, %v674
        %vm693 = vcmask 1040384
        %vm694 = vsmask.f32 256
        %vm695 = vmand %vm693, %vm694
        %v696 = vsel %vm695, 0, %v627
        %v697 = vsel %vm695, 0, %v634
        %v698 = vsel %vm695, 0, %v641
        %v699 = vsel %vm695, 0, %v648
        %v700 = vsel %vm695, 0, %v655
        %v701 = vsel %vm695, 0, %v662
        %v702 = vsel %vm695, 0, %v669
        %v703 = vsel %vm695, 0, %v676
        %v704 = vsel %vm695, %v624, 0
        %v705 = vsel %vm695, %v631, 0
        %v706 = vsel %vm695, %v638, 0
        %v707 = vsel %vm695, %v645, 0
        %v708 = vsel %vm695, %v652, 0
        %v709 = vsel %vm695, %v659, 0
        %v710 = vsel %vm695, %v666, 0
        %v711 = vsel %vm695, %v673, 0
        %vm712 = vsmask.f32 7424
        %v714 = vshrl.u32 %v696, 16
        %v716 = vshll.u32 %v696, 16
        %v718 = vrot.slane %v716, 1
        %v719 = vor.u32 %v714, %v718
        %v721 = vshll.u32 %v704, 16
        %v723 = vrot.slane %v721, 1
        %v724 = vsel %vm712, %v719, %v723
        %v726 = vshrl.u32 %v697, 16
        %v728 = vshll.u32 %v697, 16
        %v730 = vrot.slane %v728, 1
        %v731 = vor.u32 %v726, %v730
        %v733 = vshll.u32 %v705, 16
        %v735 = vrot.slane %v733, 1
        %v736 = vsel %vm712, %v731, %v735
        %v738 = vshrl.u32 %v698, 16
        %v740 = vshll.u32 %v698, 16
        %v742 = vrot.slane %v740, 1
        %v743 = vor.u32 %v738, %v742
        %v745 = vshll.u32 %v706, 16
        %v747 = vrot.slane %v745, 1
        %v748 = vsel %vm712, %v743, %v747
        %v750 = vshrl.u32 %v699, 16
        %v752 = vshll.u32 %v699, 16
        %v754 = vrot.slane %v752, 1
        %v755 = vor.u32 %v750, %v754
        %v757 = vshll.u32 %v707, 16
        %v759 = vrot.slane %v757, 1
        %v760 = vsel %vm712, %v755, %v759
        %v762 = vshrl.u32 %v700, 16
        %v764 = vshll.u32 %v700, 16
        %v766 = vrot.slane %v764, 1
        %v767 = vor.u32 %v762, %v766
        %v769 = vshll.u32 %v708, 16
        %v771 = vrot.slane %v769, 1
        %v772 = vsel %vm712, %v767, %v771
        %v774 = vshrl.u32 %v701, 16
        %v776 = vshll.u32 %v701, 16
        %v778 = vrot.slane %v776, 1
        %v779 = vor.u32 %v774, %v778
        %v781 = vshll.u32 %v709, 16
        %v783 = vrot.slane %v781, 1
        %v784 = vsel %vm712, %v779, %v783
        %785 = vrot.lane.b32.xlu0 %v724, 4
        %v786 = vpop.permute.xlu0 %785
        %787 = vrot.lane.b32.xlu0 %v736, 4
        %v788 = vpop.permute.xlu0 %787
        %789 = vrot.lane.b32.xlu0 %v748, 4
        %v790 = vpop.permute.xlu0 %789
        %791 = vrot.lane.b32.xlu0 %v760, 4
        %v792 = vpop.permute.xlu0 %791
        %793 = vrot.lane.b32.xlu0 %v772, 4
        %v794 = vpop.permute.xlu0 %793
        %795 = vrot.lane.b32.xlu0 %v784, 4
        %v796 = vpop.permute.xlu0 %795
        %vm809 = vcmask 1046528
        %v810 = vrot.slane %v696, 1
        %v811 = vrot.slane %v704, 1
        %v812 = vsel %vm809, %v810, %v811
        %v813 = vrot.slane %v697, 1
        %v814 = vrot.slane %v705, 1
        %v815 = vsel %vm809, %v813, %v814
        %v816 = vrot.slane %v698, 1
        %v817 = vrot.slane %v706, 1
        %v818 = vsel %vm809, %v816, %v817
        %v819 = vrot.slane %v699, 1
        %v820 = vrot.slane %v707, 1
        %v821 = vsel %vm809, %v819, %v820
        %v822 = vrot.slane %v700, 1
        %v823 = vrot.slane %v708, 1
        %v824 = vsel %vm809, %v822, %v823
        %v825 = vrot.slane %v701, 1
        %v826 = vrot.slane %v709, 1
        %v827 = vsel %vm809, %v825, %v826
        %828 = vrot.lane.b32.xlu0 %v812, 8
        %v829 = vpop.permute.xlu0 %828
        %830 = vrot.lane.b32.xlu0 %v815, 8
        %v831 = vpop.permute.xlu0 %830
        %832 = vrot.lane.b32.xlu0 %v818, 8
        %v833 = vpop.permute.xlu0 %832
        %834 = vrot.lane.b32.xlu0 %v821, 8
        %v835 = vpop.permute.xlu0 %834
        %836 = vrot.lane.b32.xlu0 %v824, 8
        %v837 = vpop.permute.xlu0 %836
        %838 = vrot.lane.b32.xlu0 %v827, 8
        %v839 = vpop.permute.xlu0 %838
        %841 = vrot.lane.b32.xlu0 %v697, 12
        %v842 = vpop.permute.xlu0 %841
        %843 = vrot.lane.b32.xlu0 %v698, 12
        %v844 = vpop.permute.xlu0 %843
        %845 = vrot.lane.b32.xlu0 %v699, 12
        %v846 = vpop.permute.xlu0 %845
        %847 = vrot.lane.b32.xlu0 %v700, 12
        %v848 = vpop.permute.xlu0 %847
        %849 = vrot.lane.b32.xlu0 %v701, 12
        %v850 = vpop.permute.xlu0 %849
        %851 = vrot.lane.b32.xlu0 %v702, 12
        %v852 = vpop.permute.xlu0 %851
        %v854 = vshrl.u32 %v702, 16
        %v856 = vshll.u32 %v702, 16
        %v858 = vrot.slane %v856, 1
        %v859 = vor.u32 %v854, %v858
        %v861 = vshll.u32 %v710, 16
        %v863 = vrot.slane %v861, 1
        %v864 = vsel %vm712, %v859, %v863
        %865 = vrot.lane.b32.xlu0 %v736, 16
        %v866 = vpop.permute.xlu0 %865
        %867 = vrot.lane.b32.xlu0 %v748, 16
        %v868 = vpop.permute.xlu0 %867
        %869 = vrot.lane.b32.xlu0 %v760, 16
        %v870 = vpop.permute.xlu0 %869
        %871 = vrot.lane.b32.xlu0 %v772, 16
        %v872 = vpop.permute.xlu0 %871
        %873 = vrot.lane.b32.xlu0 %v784, 16
        %v874 = vpop.permute.xlu0 %873
        %875 = vrot.lane.b32.xlu0 %v864, 16
        %v876 = vpop.permute.xlu0 %875
        %v878 = vrot.slane %v702, 1
        %v879 = vrot.slane %v710, 1
        %v880 = vsel %vm809, %v878, %v879
        %881 = vrot.lane.b32.xlu0 %v815, 20
        %v882 = vpop.permute.xlu0 %881
        %883 = vrot.lane.b32.xlu0 %v818, 20
        %v884 = vpop.permute.xlu0 %883
        %885 = vrot.lane.b32.xlu0 %v821, 20
        %v886 = vpop.permute.xlu0 %885
        %887 = vrot.lane.b32.xlu0 %v824, 20
        %v888 = vpop.permute.xlu0 %887
        %889 = vrot.lane.b32.xlu0 %v827, 20
        %v890 = vpop.permute.xlu0 %889
        %891 = vrot.lane.b32.xlu0 %v880, 20
        %v892 = vpop.permute.xlu0 %891
        %894 = vrot.lane.b32.xlu0 %v698, 24
        %v895 = vpop.permute.xlu0 %894
        %896 = vrot.lane.b32.xlu0 %v699, 24
        %v897 = vpop.permute.xlu0 %896
        %898 = vrot.lane.b32.xlu0 %v700, 24
        %v899 = vpop.permute.xlu0 %898
        %900 = vrot.lane.b32.xlu0 %v701, 24
        %v901 = vpop.permute.xlu0 %900
        %902 = vrot.lane.b32.xlu0 %v702, 24
        %v903 = vpop.permute.xlu0 %902
        %904 = vrot.lane.b32.xlu0 %v703, 24
        %v905 = vpop.permute.xlu0 %904
        %v907 = vshrl.u32 %v703, 16
        %v909 = vshll.u32 %v703, 16
        %v911 = vrot.slane %v909, 1
        %v912 = vor.u32 %v907, %v911
        %v914 = vshll.u32 %v711, 16
        %v916 = vrot.slane %v914, 1
        %v917 = vsel %vm712, %v912, %v916
        %918 = vrot.lane.b32.xlu0 %v748, 28
        %v919 = vpop.permute.xlu0 %918
        %920 = vrot.lane.b32.xlu0 %v760, 28
        %v921 = vpop.permute.xlu0 %920
        %922 = vrot.lane.b32.xlu0 %v772, 28
        %v923 = vpop.permute.xlu0 %922
        %924 = vrot.lane.b32.xlu0 %v784, 28
        %v925 = vpop.permute.xlu0 %924
        %926 = vrot.lane.b32.xlu0 %v864, 28
        %v927 = vpop.permute.xlu0 %926
        %928 = vrot.lane.b32.xlu0 %v917, 28
        %v929 = vpop.permute.xlu0 %928
        %v931 = vrot.slane %v703, 1
        %v932 = vrot.slane %v711, 1
        %v933 = vsel %vm809, %v931, %v932
        %934 = vrot.lane.b32.xlu0 %v818, 32
        %v935 = vpop.permute.xlu0 %934
        %936 = vrot.lane.b32.xlu0 %v821, 32
        %v937 = vpop.permute.xlu0 %936
        %938 = vrot.lane.b32.xlu0 %v824, 32
        %v939 = vpop.permute.xlu0 %938
        %940 = vrot.lane.b32.xlu0 %v827, 32
        %v941 = vpop.permute.xlu0 %940
        %942 = vrot.lane.b32.xlu0 %v880, 32
        %v943 = vpop.permute.xlu0 %942
        %944 = vrot.lane.b32.xlu0 %v933, 32
        %v945 = vpop.permute.xlu0 %944
        %vm946 = vcmask 31744
        %v948 = vsel %vm946, %v696, %v786
        %v950 = vsel %vm946, %v697, %v788
        %v952 = vsel %vm946, %v698, %v790
        %v954 = vsel %vm946, %v699, %v792
        %v956 = vsel %vm946, %v700, %v794
        %v958 = vsel %vm946, %v701, %v796
        %vm959 = vcmask 64512
        %v961 = vsel %vm959, %v948, %v829
        %v963 = vsel %vm959, %v950, %v831
        %v965 = vsel %vm959, %v952, %v833
        %v967 = vsel %vm959, %v954, %v835
        %v969 = vsel %vm959, %v956, %v837
        %v971 = vsel %vm959, %v958, %v839
        %vm972 = vcmask 97280
        %v974 = vsel %vm972, %v961, %v842
        %v976 = vsel %vm972, %v963, %v844
        %v978 = vsel %vm972, %v965, %v846
        %v980 = vsel %vm972, %v967, %v848
        %v982 = vsel %vm972, %v969, %v850
        %v984 = vsel %vm972, %v971, %v852
        %vm985 = vcmask 130048
        %v987 = vsel %vm985, %v974, %v866
        %v989 = vsel %vm985, %v976, %v868
        %v991 = vsel %vm985, %v978, %v870
        %v993 = vsel %vm985, %v980, %v872
        %v995 = vsel %vm985, %v982, %v874
        %v997 = vsel %vm985, %v984, %v876
        %vm998 = vcmask 162816
        %v1000 = vsel %vm998, %v987, %v882
        %v1002 = vsel %vm998, %v989, %v884
        %v1004 = vsel %vm998, %v991, %v886
        %v1006 = vsel %vm998, %v993, %v888
        %v1008 = vsel %vm998, %v995, %v890
        %v1010 = vsel %vm998, %v997, %v892
        %vm1011 = vcmask 195584
        %v1013 = vsel %vm1011, %v1000, %v895
        %v1015 = vsel %vm1011, %v1002, %v897
        %v1017 = vsel %vm1011, %v1004, %v899
        %v1019 = vsel %vm1011, %v1006, %v901
        %v1021 = vsel %vm1011, %v1008, %v903
        %v1023 = vsel %vm1011, %v1010, %v905
        %vm1024 = vcmask 228352
        %v1026 = vsel %vm1024, %v1013, %v919
        %v1028 = vsel %vm1024, %v1015, %v921
        %v1030 = vsel %vm1024, %v1017, %v923
        %v1032 = vsel %vm1024, %v1019, %v925
        %v1034 = vsel %vm1024, %v1021, %v927
        %v1036 = vsel %vm1024, %v1023, %v929
        %vm1037 = vcmask 261120
        %v1039 = vsel %vm1037, %v1026, %v935
        %v1041 = vsel %vm1037, %v1028, %v937
        %v1043 = vsel %vm1037, %v1030, %v939
        %v1045 = vsel %vm1037, %v1032, %v941
        %v1047 = vsel %vm1037, %v1034, %v943
        %v1049 = vsel %vm1037, %v1036, %v945
        %v1050 = vld [vmem:[%s3] sm:$0xf]
        %v1051 = vld [vmem:[%s3 + $0x4] sm:$0xf]
        %v1052 = vld [vmem:[%s3 + $0x8] sm:$0xf]
        %v1053 = vld [vmem:[%s3 + $0xc] sm:$0xf]
        %v1054 = vld [vmem:[%s3 + $0x10] sm:$0x3]
        %v1055 = vld [vmem:[%s4] sm:$0x1]
        %v1057 = vperm.slane %v1055, 0
        %v1064 = vunpack.c.l.b16 %v1050
        %v1065 = vunpack.c.l.b16 %v1051
        %v1066 = vunpack.c.l.b16 %v1052
        %v1067 = vunpack.c.l.b16 %v1053
        %v1068 = vunpack.c.l.b16 %v1054
        %v1069 = vpack.c.b16 %v1065, %v1064
        %v1070 = vpack.c.b16 %v1067, %v1066
        %v1071 = vpack.c.b16 %v1068, %v1068
        %vm1074 = vcmask 293888
        %v1075 = vsel %vm1074, %v1039, 0
        %v1077 = vsel %vm1074, %v1041, 0
        %v1079 = vsel %vm1074, %v1043, 0
        %v1081 = vsel %vm1074, %v1045, 0
        %v1083 = vsel %vm1074, %v1047, 0
        %v1085 = vsel %vm1074, %v1049, 0
        %vm1087 = vcmask 1041408
        %v1089 = vsel %vm1087, %v1071, 0
        %1091 = vmatpush.bf16.msra.mxu0 0
        %1092 = vmatpush.bf16.msra.mxu0 0
        %1093 = vmatpush.bf16.msra.mxu0 0
        %1094 = vmatpush.bf16.msra.mxu0 0
        %1095 = vmatpush.bf16.msra.mxu0 0
        %1096 = vmatpush.bf16.msra.mxu0 %v1089
        %1097 = vmatpush.bf16.msra.mxu0 %v1070
        %1098 = vmatpush.bf16.msra.mxu0 %v1069
        %1099 = vmatmul.bf16.gmra.mxu0 %v1075
        %v1100 = vpop.f32.mrf.mxu0
        %v1101 = vadd.f32 %v1057, %v1100
        %v1102 = vpop.f32.mrf.mxu0
        %v1103 = vadd.f32 %v1057, %v1102
        %1104 = vmatmul.bf16.gmra.mxu0 %v1077
        %v1105 = vpop.f32.mrf.mxu0
        %v1106 = vadd.f32 %v1057, %v1105
        %v1107 = vpop.f32.mrf.mxu0
        %v1108 = vadd.f32 %v1057, %v1107
        %1109 = vmatmul.bf16.gmra.mxu0 %v1079
        %v1110 = vpop.f32.mrf.mxu0
        %v1111 = vadd.f32 %v1057, %v1110
        %v1112 = vpop.f32.mrf.mxu0
        %v1113 = vadd.f32 %v1057, %v1112
        %1114 = vmatmul.bf16.gmra.mxu0 %v1081
        %v1115 = vpop.f32.mrf.mxu0
        %v1116 = vadd.f32 %v1057, %v1115
        %v1117 = vpop.f32.mrf.mxu0
        %v1118 = vadd.f32 %v1057, %v1117
        %1119 = vmatmul.bf16.gmra.mxu0 %v1083
        %v1120 = vpop.f32.mrf.mxu0
        %v1121 = vadd.f32 %v1057, %v1120
        %v1122 = vpop.f32.mrf.mxu0
        %v1123 = vadd.f32 %v1057, %v1122
        %1124 = vmatmul.bf16.gmra.mxu0 %v1085
        %v1125 = vpop.f32.mrf.mxu0
        %v1126 = vadd.f32 %v1057, %v1125
        %v1127 = vpop.f32.mrf.mxu0
        %v1128 = vadd.f32 %v1057, %v1127
        %1129 = vdwg.mxu0
        %v1130 = vmax.f32 %v1101, 0.0
        %v1131 = vmax.f32 %v1103, 0.0
        %v1132 = vmax.f32 %v1106, 0.0
        %v1133 = vmax.f32 %v1108, 0.0
        %v1134 = vmax.f32 %v1111, 0.0
        %v1135 = vmax.f32 %v1113, 0.0
        %v1136 = vmax.f32 %v1116, 0.0
        %v1137 = vmax.f32 %v1118, 0.0
        %v1138 = vmax.f32 %v1121, 0.0
        %v1139 = vmax.f32 %v1123, 0.0
        %v1140 = vmax.f32 %v1126, 0.0
        %v1141 = vmax.f32 %v1128, 0.0
        %v1142 = vpack.c.bf16 %v1130, %v1130
        %v1143 = vpack.c.bf16 %v1131, %v1131
        %v1144 = vpack.c.bf16 %v1132, %v1132
        %v1145 = vpack.c.bf16 %v1133, %v1133
        %v1146 = vpack.c.bf16 %v1134, %v1134
        %v1147 = vpack.c.bf16 %v1135, %v1135
        %v1148 = vpack.c.bf16 %v1136, %v1136
        %v1149 = vpack.c.bf16 %v1137, %v1137
        %v1150 = vpack.c.bf16 %v1138, %v1138
        %v1151 = vpack.c.bf16 %v1139, %v1139
        %v1152 = vpack.c.bf16 %v1140, %v1140
        %v1153 = vpack.c.bf16 %v1141, %v1141
        %s1154 = ssub.s32 %s499, 1
        %v1155 = vstv %s1154
        %v1156 = vadd.s32 %v1155, 1
        %v1157 = vadd.s32 %v1155, 2
        %v1158 = vadd.s32 %v1155, 3
        %v1159 = vadd.s32 %v1155, 4
        %v1160 = vadd.s32 %v1155, 5
        %vm1161 = vcmp.ge.s32.totalorder %v1155, 0
        %vm1162 = vcmp.ge.s32.totalorder %v1156, 0
        %vm1163 = vcmp.ge.s32.totalorder %v1157, 0
        %vm1164 = vcmp.ge.s32.totalorder %v1158, 0
        %vm1165 = vcmp.ge.s32.totalorder %v1159, 0
        %vm1166 = vcmp.ge.s32.totalorder %v1160, 0
        %vm1167 = vcmp.lt.s32.totalorder %v1155, 16
        %vm1168 = vcmp.lt.s32.totalorder %v1156, 16
        %vm1169 = vcmp.lt.s32.totalorder %v1157, 16
        %vm1170 = vcmp.lt.s32.totalorder %v1158, 16
        %vm1171 = vcmp.lt.s32.totalorder %v1159, 16
        %vm1172 = vcmp.lt.s32.totalorder %v1160, 16
        %vm1173 = vmand %vm1161, %vm1167
        %vm1174 = vmand %vm1162, %vm1168
        %vm1175 = vmand %vm1163, %vm1169
        %vm1176 = vmand %vm1164, %vm1170
        %vm1177 = vmand %vm1165, %vm1171
        %vm1178 = vmand %vm1166, %vm1172
        %v1179 = vsel %vm1173, 1, 0
        %v1180 = vsel %vm1174, 1, 0
        %v1181 = vsel %vm1175, 1, 0
        %v1182 = vsel %vm1176, 1, 0
        %v1183 = vsel %vm1177, 1, 0
        %v1184 = vsel %vm1178, 1, 0
        %vm1185 = vcmp.eq.s32.totalorder %v1179, 1
        %vm1186 = vcmp.eq.s32.totalorder %v1180, 1
        %vm1187 = vcmp.eq.s32.totalorder %v1181, 1
        %vm1188 = vcmp.eq.s32.totalorder %v1182, 1
        %vm1189 = vcmp.eq.s32.totalorder %v1183, 1
        %vm1190 = vcmp.eq.s32.totalorder %v1184, 1
        %v1191 = vsel %vm1185, %v1142, 0
        %v1192 = vsel %vm1185, %v1143, 0
        %v1193 = vsel %vm1186, %v1144, 0
        %v1194 = vsel %vm1186, %v1145, 0
        %v1195 = vsel %vm1187, %v1146, 0
        %v1196 = vsel %vm1187, %v1147, 0
        %v1197 = vsel %vm1188, %v1148, 0
        %v1198 = vsel %vm1188, %v1149, 0
        %v1199 = vsel %vm1189, %v1150, 0
        %v1200 = vsel %vm1189, %v1151, 0
        %v1201 = vsel %vm1190, %v1152, 0
        %v1202 = vsel %vm1190, %v1153, 0
        %v1215 = vunpack.c.l.b16 %v1191
        %v1216 = vunpack.c.l.b16 %v1192
        %v1217 = vunpack.c.l.b16 %v1193
        %v1218 = vunpack.c.l.b16 %v1194
        %v1219 = vunpack.c.l.b16 %v1195
        %v1220 = vunpack.c.l.b16 %v1196
        %v1221 = vunpack.c.l.b16 %v1197
        %v1222 = vunpack.c.l.b16 %v1198
        %v1223 = vunpack.c.l.b16 %v1199
        %v1224 = vunpack.c.l.b16 %v1200
        %v1225 = vunpack.c.l.b16 %v1201
        %v1226 = vunpack.c.l.b16 %v1202
        %v1227 = vpack.c.b16 %v1216, %v1215
        %v1228 = vpack.c.b16 %v1218, %v1217
        %v1229 = vpack.c.b16 %v1220, %v1219
        %v1230 = vpack.c.b16 %v1222, %v1221
        %v1231 = vpack.c.b16 %v1224, %v1223
        %v1232 = vpack.c.b16 %v1226, %v1225
        %v1234 = vshrl.u32 %v1227, 16
        %v1236 = vrot.slane %v1234, 7
        %v1237 = vshll.u32 %v1227, 16
        %v1239 = vor.u32 %v1236, %v1237
        %v1241 = vshrl.u32 %v1228, 16
        %v1243 = vrot.slane %v1241, 7
        %v1244 = vshll.u32 %v1228, 16
        %v1246 = vor.u32 %v1243, %v1244
        %v1248 = vshrl.u32 %v1229, 16
        %v1250 = vrot.slane %v1248, 7
        %v1251 = vshll.u32 %v1229, 16
        %v1253 = vor.u32 %v1250, %v1251
        %v1255 = vshrl.u32 %v1230, 16
        %v1257 = vrot.slane %v1255, 7
        %v1258 = vshll.u32 %v1230, 16
        %v1260 = vor.u32 %v1257, %v1258
        %v1262 = vshrl.u32 %v1231, 16
        %v1264 = vrot.slane %v1262, 7
        %v1265 = vshll.u32 %v1231, 16
        %v1267 = vor.u32 %v1264, %v1265
        %v1269 = vshrl.u32 %v1232, 16
        %v1271 = vrot.slane %v1269, 7
        %v1272 = vshll.u32 %v1232, 16
        %v1274 = vor.u32 %v1271, %v1272
        %v1287 = vsel %vm695, 0, %v1239
        %v1288 = vsel %vm695, 0, %v1246
        %v1289 = vsel %vm695, 0, %v1253
        %v1290 = vsel %vm695, 0, %v1260
        %v1291 = vsel %vm695, 0, %v1267
        %v1292 = vsel %vm695, 0, %v1274
        %v1293 = vsel %vm695, %v1236, 0
        %v1294 = vsel %vm695, %v1243, 0
        %v1295 = vsel %vm695, %v1250, 0
        %v1296 = vsel %vm695, %v1257, 0
        %v1297 = vsel %vm695, %v1264, 0
        %v1298 = vsel %vm695, %v1271, 0
        %v1300 = vshrl.u32 %v1287, 16
        %v1302 = vshll.u32 %v1287, 16
        %v1304 = vrot.slane %v1302, 1
        %v1305 = vor.u32 %v1300, %v1304
        %v1307 = vshll.u32 %v1293, 16
        %v1309 = vrot.slane %v1307, 1
        %v1310 = vsel %vm712, %v1305, %v1309
        %v1312 = vshrl.u32 %v1288, 16
        %v1314 = vshll.u32 %v1288, 16
        %v1316 = vrot.slane %v1314, 1
        %v1317 = vor.u32 %v1312, %v1316
        %v1319 = vshll.u32 %v1294, 16
        %v1321 = vrot.slane %v1319, 1
        %v1322 = vsel %vm712, %v1317, %v1321
        %v1324 = vshrl.u32 %v1289, 16
        %v1326 = vshll.u32 %v1289, 16
        %v1328 = vrot.slane %v1326, 1
        %v1329 = vor.u32 %v1324, %v1328
        %v1331 = vshll.u32 %v1295, 16
        %v1333 = vrot.slane %v1331, 1
        %v1334 = vsel %vm712, %v1329, %v1333
        %v1336 = vshrl.u32 %v1290, 16
        %v1338 = vshll.u32 %v1290, 16
        %v1340 = vrot.slane %v1338, 1
        %v1341 = vor.u32 %v1336, %v1340
        %v1343 = vshll.u32 %v1296, 16
        %v1345 = vrot.slane %v1343, 1
        %v1346 = vsel %vm712, %v1341, %v1345
        %1347 = vrot.lane.b32.xlu0 %v1310, 8
        %v1348 = vpop.permute.xlu0 %1347
        %1349 = vrot.lane.b32.xlu0 %v1322, 8
        %v1350 = vpop.permute.xlu0 %1349
        %1351 = vrot.lane.b32.xlu0 %v1334, 8
        %v1352 = vpop.permute.xlu0 %1351
        %1353 = vrot.lane.b32.xlu0 %v1346, 8
        %v1354 = vpop.permute.xlu0 %1353
        %v1363 = vrot.slane %v1287, 1
        %v1364 = vrot.slane %v1293, 1
        %v1365 = vsel %vm809, %v1363, %v1364
        %v1366 = vrot.slane %v1288, 1
        %v1367 = vrot.slane %v1294, 1
        %v1368 = vsel %vm809, %v1366, %v1367
        %v1369 = vrot.slane %v1289, 1
        %v1370 = vrot.slane %v1295, 1
        %v1371 = vsel %vm809, %v1369, %v1370
        %v1372 = vrot.slane %v1290, 1
        %v1373 = vrot.slane %v1296, 1
        %v1374 = vsel %vm809, %v1372, %v1373
        %1375 = vrot.lane.b32.xlu0 %v1365, 16
        %v1376 = vpop.permute.xlu0 %1375
        %1377 = vrot.lane.b32.xlu0 %v1368, 16
        %v1378 = vpop.permute.xlu0 %1377
        %1379 = vrot.lane.b32.xlu0 %v1371, 16
        %v1380 = vpop.permute.xlu0 %1379
        %1381 = vrot.lane.b32.xlu0 %v1374, 16
        %v1382 = vpop.permute.xlu0 %1381
        %1384 = vrot.lane.b32.xlu0 %v1288, 24
        %v1385 = vpop.permute.xlu0 %1384
        %1386 = vrot.lane.b32.xlu0 %v1289, 24
        %v1387 = vpop.permute.xlu0 %1386
        %1388 = vrot.lane.b32.xlu0 %v1290, 24
        %v1389 = vpop.permute.xlu0 %1388
        %1390 = vrot.lane.b32.xlu0 %v1291, 24
        %v1391 = vpop.permute.xlu0 %1390
        %v1393 = vshrl.u32 %v1291, 16
        %v1395 = vshll.u32 %v1291, 16
        %v1397 = vrot.slane %v1395, 1
        %v1398 = vor.u32 %v1393, %v1397
        %v1400 = vshll.u32 %v1297, 16
        %v1402 = vrot.slane %v1400, 1
        %v1403 = vsel %vm712, %v1398, %v1402
        %1404 = vrot.lane.b32.xlu0 %v1322, 32
        %v1405 = vpop.permute.xlu0 %1404
        %1406 = vrot.lane.b32.xlu0 %v1334, 32
        %v1407 = vpop.permute.xlu0 %1406
        %1408 = vrot.lane.b32.xlu0 %v1346, 32
        %v1409 = vpop.permute.xlu0 %1408
        %1410 = vrot.lane.b32.xlu0 %v1403, 32
        %v1411 = vpop.permute.xlu0 %1410
        %v1413 = vrot.slane %v1291, 1
        %v1414 = vrot.slane %v1297, 1
        %v1415 = vsel %vm809, %v1413, %v1414
        %1416 = vrot.lane.b32.xlu0 %v1368, 40
        %v1417 = vpop.permute.xlu0 %1416
        %1418 = vrot.lane.b32.xlu0 %v1371, 40
        %v1419 = vpop.permute.xlu0 %1418
        %1420 = vrot.lane.b32.xlu0 %v1374, 40
        %v1421 = vpop.permute.xlu0 %1420
        %1422 = vrot.lane.b32.xlu0 %v1415, 40
        %v1423 = vpop.permute.xlu0 %1422
        %1425 = vrot.lane.b32.xlu0 %v1289, 48
        %v1426 = vpop.permute.xlu0 %1425
        %1427 = vrot.lane.b32.xlu0 %v1290, 48
        %v1428 = vpop.permute.xlu0 %1427
        %1429 = vrot.lane.b32.xlu0 %v1291, 48
        %v1430 = vpop.permute.xlu0 %1429
        %1431 = vrot.lane.b32.xlu0 %v1292, 48
        %v1432 = vpop.permute.xlu0 %1431
        %v1434 = vshrl.u32 %v1292, 16
        %v1436 = vshll.u32 %v1292, 16
        %v1438 = vrot.slane %v1436, 1
        %v1439 = vor.u32 %v1434, %v1438
        %v1441 = vshll.u32 %v1298, 16
        %v1443 = vrot.slane %v1441, 1
        %v1444 = vsel %vm712, %v1439, %v1443
        %1445 = vrot.lane.b32.xlu0 %v1334, 56
        %v1446 = vpop.permute.xlu0 %1445
        %1447 = vrot.lane.b32.xlu0 %v1346, 56
        %v1448 = vpop.permute.xlu0 %1447
        %1449 = vrot.lane.b32.xlu0 %v1403, 56
        %v1450 = vpop.permute.xlu0 %1449
        %1451 = vrot.lane.b32.xlu0 %v1444, 56
        %v1452 = vpop.permute.xlu0 %1451
        %v1454 = vrot.slane %v1292, 1
        %v1455 = vrot.slane %v1298, 1
        %v1456 = vsel %vm809, %v1454, %v1455
        %1457 = vrot.lane.b32.xlu0 %v1371, 64
        %v1458 = vpop.permute.xlu0 %1457
        %1459 = vrot.lane.b32.xlu0 %v1374, 64
        %v1460 = vpop.permute.xlu0 %1459
        %1461 = vrot.lane.b32.xlu0 %v1415, 64
        %v1462 = vpop.permute.xlu0 %1461
        %1463 = vrot.lane.b32.xlu0 %v1456, 64
        %v1464 = vpop.permute.xlu0 %1463
        %v1466 = vsel %vm959, %v1287, %v1348
        %v1468 = vsel %vm959, %v1288, %v1350
        %v1470 = vsel %vm959, %v1289, %v1352
        %v1472 = vsel %vm959, %v1290, %v1354
        %v1474 = vsel %vm985, %v1466, %v1376
        %v1476 = vsel %vm985, %v1468, %v1378
        %v1478 = vsel %vm985, %v1470, %v1380
        %v1480 = vsel %vm985, %v1472, %v1382
        %v1482 = vsel %vm1011, %v1474, %v1385
        %v1484 = vsel %vm1011, %v1476, %v1387
        %v1486 = vsel %vm1011, %v1478, %v1389
        %v1488 = vsel %vm1011, %v1480, %v1391
        %v1490 = vsel %vm1037, %v1482, %v1405
        %v1492 = vsel %vm1037, %v1484, %v1407
        %v1494 = vsel %vm1037, %v1486, %v1409
        %v1496 = vsel %vm1037, %v1488, %v1411
        %vm1497 = vcmask 326656
        %v1499 = vsel %vm1497, %v1490, %v1417
        %v1501 = vsel %vm1497, %v1492, %v1419
        %v1503 = vsel %vm1497, %v1494, %v1421
        %v1505 = vsel %vm1497, %v1496, %v1423
        %vm1506 = vcmask 392192
        %v1508 = vsel %vm1506, %v1499, %v1426
        %v1510 = vsel %vm1506, %v1501, %v1428
        %v1512 = vsel %vm1506, %v1503, %v1430
        %v1514 = vsel %vm1506, %v1505, %v1432
        %vm1515 = vcmask 457728
        %v1517 = vsel %vm1515, %v1508, %v1446
        %v1519 = vsel %vm1515, %v1510, %v1448
        %v1521 = vsel %vm1515, %v1512, %v1450
        %v1523 = vsel %vm1515, %v1514, %v1452
        %vm1524 = vcmask 523264
        %v1526 = vsel %vm1524, %v1517, %v1458
        %v1528 = vsel %vm1524, %v1519, %v1460
        %v1530 = vsel %vm1524, %v1521, %v1462
        %v1532 = vsel %vm1524, %v1523, %v1464
        %v1533 = vld [vmem:[%s5] sm:$0xf]
        %v1534 = vld [vmem:[%s5 + $0x4] sm:$0xf]
        %v1535 = vld [vmem:[%s5 + $0x8] sm:$0xf]
        %v1536 = vld [vmem:[%s5 + $0xc] sm:$0xf]
        %v1537 = vld [vmem:[%s5 + $0x10] sm:$0xf]
        %v1538 = vld [vmem:[%s5 + $0x14] sm:$0xf]
        %v1539 = vld [vmem:[%s5 + $0x18] sm:$0xf]
        %v1540 = vld [vmem:[%s5 + $0x1c] sm:$0xf]
        %v1541 = vld [vmem:[%s5 + $0x20] sm:$0xf]
        %v1542 = vld [vmem:[%s6] sm:$0x1]
        %v1544 = vperm.slane %v1542, 0
        %v1555 = vunpack.c.l.b16 %v1533
        %v1556 = vunpack.c.l.b16 %v1534
        %v1557 = vunpack.c.l.b16 %v1535
        %v1558 = vunpack.c.l.b16 %v1536
        %v1559 = vunpack.c.l.b16 %v1537
        %v1560 = vunpack.c.l.b16 %v1538
        %v1561 = vunpack.c.l.b16 %v1539
        %v1562 = vunpack.c.l.b16 %v1540
        %v1563 = vunpack.c.l.b16 %v1541
        %v1564 = vpack.c.b16 %v1556, %v1555
        %v1565 = vpack.c.b16 %v1558, %v1557
        %v1566 = vpack.c.b16 %v1560, %v1559
        %v1567 = vpack.c.b16 %v1562, %v1561
        %v1568 = vpack.c.b16 %v1563, %v1563
        %vm1573 = vcmask 588800
        %v1574 = vsel %vm1573, %v1526, 0
        %v1576 = vsel %vm1573, %v1528, 0
        %v1578 = vsel %vm1573, %v1530, 0
        %v1580 = vsel %vm1573, %v1532, 0
        %vm1582 = vcmask 1043456
        %v1584 = vsel %vm1582, %v1568, 0
        %1586 = vmatpush.bf16.msra.mxu0 0
        %1587 = vmatpush.bf16.msra.mxu0 0
        %1588 = vmatpush.bf16.msra.mxu0 0
        %1589 = vmatpush.bf16.msra.mxu0 %v1584
        %1590 = vmatpush.bf16.msra.mxu0 %v1567
        %1591 = vmatpush.bf16.msra.mxu0 %v1566
        %1592 = vmatpush.bf16.msra.mxu0 %v1565
        %1593 = vmatpush.bf16.msra.mxu0 %v1564
        %1594 = vmatmul.bf16.gmra.mxu0 %v1574
        %v1595 = vpop.f32.mrf.mxu0
        %v1596 = vadd.f32 %v1544, %v1595
        %v1597 = vpop.f32.mrf.mxu0
        %v1598 = vadd.f32 %v1544, %v1597
        %1599 = vmatmul.bf16.gmra.mxu0 %v1576
        %v1600 = vpop.f32.mrf.mxu0
        %v1601 = vadd.f32 %v1544, %v1600
        %v1602 = vpop.f32.mrf.mxu0
        %v1603 = vadd.f32 %v1544, %v1602
        %1604 = vmatmul.bf16.gmra.mxu0 %v1578
        %v1605 = vpop.f32.mrf.mxu0
        %v1606 = vadd.f32 %v1544, %v1605
        %v1607 = vpop.f32.mrf.mxu0
        %v1608 = vadd.f32 %v1544, %v1607
        %1609 = vmatmul.bf16.gmra.mxu0 %v1580
        %v1610 = vpop.f32.mrf.mxu0
        %v1611 = vadd.f32 %v1544, %v1610
        %v1612 = vpop.f32.mrf.mxu0
        %v1613 = vadd.f32 %v1544, %v1612
        %1614 = vdwg.mxu0
        %v1615 = vmax.f32 %v1596, 0.0
        %v1616 = vmax.f32 %v1598, 0.0
        %v1617 = vmax.f32 %v1601, 0.0
        %v1618 = vmax.f32 %v1603, 0.0
        %v1619 = vmax.f32 %v1606, 0.0
        %v1620 = vmax.f32 %v1608, 0.0
        %v1621 = vmax.f32 %v1611, 0.0
        %v1622 = vmax.f32 %v1613, 0.0
        %1623 = vst.msk [vmem:[%s495] sm:$0xff] %vm959, %v1615
        %1624 = vst.msk [vmem:[%s495 + $0x8] sm:$0xff] %vm959, %v1616
        %1625 = vst.msk [vmem:[%s495 + $0x10] sm:$0xff] %vm959, %v1617
        %1626 = vst.msk [vmem:[%s495 + $0x18] sm:$0xff] %vm959, %v1618
        %1627 = vst.msk [vmem:[%s495 + $0x20] sm:$0xff] %vm959, %v1619
        %1628 = vst.msk [vmem:[%s495 + $0x28] sm:$0xff] %vm959, %v1620
        %1629 = vst.msk [vmem:[%s495 + $0x30] sm:$0xff] %vm959, %v1621
        %1630 = vst.msk [vmem:[%s495 + $0x38] sm:$0xff] %vm959, %v1622
        %v1631 = vmax.f32 %v1615, %v1617
        %v1632 = vmax.f32 %v1616, %v1618
        %v1633 = vmax.f32 %v1619, %v1621
        %v1634 = vmax.f32 %v1620, %v1622
        %1635 = vst.msk [vmem:[#allocation2] sm:$0xff] %vm959, %v1631
        %1636 = vst.msk [vmem:[#allocation2 + $0x8] sm:$0xff] %vm959, %v1632
        %1637 = vst.msk [vmem:[#allocation2 + $0x10] sm:$0xff] %vm959, %v1633
        %1638 = vst.msk [vmem:[#allocation2 + $0x18] sm:$0xff] %vm959, %v1634
        %v1639 = vld [vmem:[#allocation2] ss:$2 sm:$0xff]
        %s1640 = scalar_lea.vmem [#allocation2], 16
        %v1641 = vld [vmem:[%s1640] ss:$2 sm:$0xff]
        %s1642 = scalar_lea.vmem [#allocation2], 1
        %v1643 = vld [vmem:[%s1642] ss:$2 sm:$0xff]
        %s1644 = scalar_lea.vmem [#allocation2], 17
        %v1645 = vld [vmem:[%s1644] ss:$2 sm:$0xff]
        %v1646 = vmax.f32 %v1639, %v1643
        %v1647 = vmax.f32 %v1641, %v1645
        %1648 = vst.msk [vmem:[%s436] sm:$0xff] %vm959, %v1646
        %1649 = vst.msk [vmem:[%s436 + $0x8] sm:$0xff] %vm959, %v1647
        %s1650 = smul.u32 4, %s28
        %p1651 = scmp.lt.s32.totalorder %s27, 1
        %s1652 = scalar_select %p1651, %s27, 1
        %p1653 = scmp.lt.s32.totalorder %s1650, 15
        %s1654 = scalar_select %p1653, %s1650, 15
        %s1655 = smul.addr %s1654, 2
        %s1656 = smul.addr %s1652, 32
        %s1657 = sadd.s32 %s1655, %s1656
        %s1658 = smul.addr %s1657, 8
        %s1659 = scalar_lea.vmem %s7, %s1658
        %s1660 = sand.u32 %s257, 1
        %s1661 = scalar_lea.sflag [#allocation4], %s1660
        %s1662 = sand.u32 %s257, 1
        %s1663 = smul.addr %s1662, 16
        %s1664 = scalar_lea.vmem [#allocation3], %s1663
        // Predicated region
        $region49: #{tpu_custom_call.1} parent=47 // pred_check
          %p1665 = pneg %p239
        $region50: #{tpu_custom_call.1} parent=47 // pred_check_branch
          %1667 = sbr.rel (%p1665) target = $region52
        $region51: #{tpu_custom_call.1} parent=47 // pred_region
          %s1668 = smul.u32 4, %s28
        $region52: #{tpu_custom_call.1} parent=47 // pred_fallthru
          _
        // Predicated region
        $region53: #{tpu_custom_call.1} parent=47 // pred_check
          %p1669 = pneg %p267
        $region54: #{tpu_custom_call.1} parent=47 // pred_check_branch
          %1671 = sbr.rel (%p1669) target = $region56
        $region55: #{tpu_custom_call.1} parent=47 // pred_region
          %s1672 = smul.u32 2, %s28
          %1674 = vsyncadd %s1661, 0
          %s1675 = smul.addr %s27, 8
          %s1676 = sadd.s32 %s1672, %s1675
          %s1677 = smul.addr %s1676, 8
          %s1678 = scalar_lea.hbm %s8, %s1677
          %s1679 = sshll.u32 %s1664, 4
          %s1680 = int_to_ptr.vmem [resolvable:$true] %s1679
          %s1681 = sshll.u32 %s1678, 4
          %s1682 = int_to_ptr.hbm [resolvable:$true] %s1681
          %1687 = dma.vmem_to_hbm [thread:$0]  %s1680, 256, %s1682, %s1661, 128, 128, 8
        $region56: #{tpu_custom_call.1} parent=47 // pred_fallthru
          _
      $region48: #{tpu_custom_call.1} parent=5 // pred_fallthru
        _
      %p1688 = scmp.le.s32.totalorder 2, %s18
      // Predicated region
      $region57: #{tpu_custom_call.1} parent=5 // pred_check
        %p1689 = pneg %p1688
      $region58: #{tpu_custom_call.1} parent=5 // pred_check_branch
        %1691 = sbr.rel (%p1689) target = $region60
      $region59: #{tpu_custom_call.1} parent=5 // pred_region
        %s1692 = ssub.s32 %s18, 2
        // Predicated region
        $region61: #{tpu_custom_call.1} parent=59 // pred_check
          %p1693 = pneg %p245
        $region62: #{tpu_custom_call.1} parent=59 // pred_check_branch
          %1695 = sbr.rel (%p1693) target = $region64
        $region63: #{tpu_custom_call.1} parent=59 // pred_region
          %s1696 = smul.u32 4, %s30
          %p1697 = scmp.lt.s32.totalorder %s29, 1
          %s1698 = scalar_select %p1697, %s29, 1
          %p1699 = scmp.lt.s32.totalorder %s1696, 15
          %s1700 = scalar_select %p1699, %s1696, 15
          %s1701 = smul.addr %s1700, 2
          %s1702 = smul.addr %s1698, 32
          %s1703 = sadd.s32 %s1701, %s1702
          %s1704 = smul.addr %s1703, 8
          %s1705 = scalar_lea.vmem %s7, %s1704
        $region64: #{tpu_custom_call.1} parent=59 // pred_fallthru
          _
        // Predicated region
        $region65: #{tpu_custom_call.1} parent=59 // pred_check
          %p1706 = pneg %p273
        $region66: #{tpu_custom_call.1} parent=59 // pred_check_branch
          %1708 = sbr.rel (%p1706) target = $region68
        $region67: #{tpu_custom_call.1} parent=59 // pred_region
          %s1709 = sand.u32 %s258, 1
          %s1710 = scalar_lea.sflag [#allocation4], %s1709
          %s1711 = sand.u32 %s258, 1
          %s1712 = smul.addr %s1711, 16
          %s1713 = scalar_lea.vmem [#allocation3], %s1712
          %1715 = dma.done %s1710, 256
        $region68: #{tpu_custom_call.1} parent=59 // pred_fallthru
          _
      $region60: #{tpu_custom_call.1} parent=5 // pred_fallthru
        _
    $region6: #{tpu_custom_call.1} parent=1 // loop_footer
      %s22 = sadd.s32 1, %s18
    $region7: #{tpu_custom_call.1} parent=1 // loop_footer_branch
      %17 = sbr.rel target = $region3
    $region8: #{tpu_custom_call.1} parent=1 // loop_exit
      _
    %1716 = vsyncpa [#allocation4], 1
    %s1717 = scalar_lea.sflag [#allocation4], 1
    %1718 = vsyncpa %s1717, 1

</llo_original>
